<compile_context>
chip_gen: v7x
topology: tpu7x:2x2x1
jax: 0.10.0
libtpu: 0.0.40
codegen_flags: <defaults>
</compile_context>

<pallas_src>
import math

import jax
import jax.numpy as jnp
import numpy as np
from jax.experimental import pallas as pl
from jax.experimental.pallas import tpu as pltpu

# ---- small config consistent with the module ----
B = 2                  # batch
T = 8                  # sequence length (<= block_size)
C = 32                 # n_embd
N_HEAD = 4
HEAD_DIM = C // N_HEAD
M = B * T              # rows processed per kernel invocation
EPS = 1e-5
LANES = 128            # lane width of the packed parameter slabs (4*C == 128)
W_ROWS = 7 * C         # weight slab rows: C (qkv) + C (attn proj) + C (fc) + 4C (ffn proj)
NEG_INF = -1e30        # finite additive causal-mask value


def _layer_norm(v, w, b):
    # F.layer_norm over last dim, eps=1e-5 (biased variance)
    mu = jnp.mean(v, axis=-1, keepdims=True)
    var = jnp.mean((v - mu) ** 2, axis=-1, keepdims=True)
    return (v - mu) * jax.lax.rsqrt(var + EPS) * w + b


def _erf(z):
    # Abramowitz & Stegun 7.1.26 (max abs err ~1.5e-7); uses only exp/VPU ops so it
    # lowers cleanly in Mosaic while keeping nn.GELU()'s exact-erf semantics.
    a1, a2, a3, a4, a5 = 0.254829592, -0.284496736, 1.421413741, -1.453152027, 1.061405429
    pp = 0.3275911
    sgn = jnp.where(z >= 0.0, 1.0, -1.0)
    az = jnp.abs(z)
    t = 1.0 / (1.0 + pp * az)
    poly = ((((a5 * t + a4) * t + a3) * t + a2) * t + a1) * t
    return sgn * (1.0 - poly * jnp.exp(-az * az))


def _gelu_exact(u):
    return 0.5 * u * (1.0 + _erf(u * (1.0 / math.sqrt(2.0))))


def transformer_block_kernel(x_ref, wslab_ref, bslab_ref, o_ref):
    x = x_ref[...]                                             # (M, C)

    # ---- packed parameter views (static, sublane-aligned ref slices) ----
    ln1w, ln1b = bslab_ref[0:1, :C], bslab_ref[1:2, :C]
    b_qkv = bslab_ref[2:3, :]                                  # (1, 128); lanes >= 3C are zero
    b_attn = bslab_ref[3:4, :C]
    ln2w, ln2b = bslab_ref[4:5, :C], bslab_ref[5:6, :C]
    b_fc = bslab_ref[6:7, :]                                   # (1, 128) == (1, 4C)
    b_fp = bslab_ref[7:8, :C]

    w_qkv = wslab_ref[0:C, :]                                  # (C, 128); lanes >= 3C are zero
    w_fc = wslab_ref[2 * C:3 * C, :]                           # (C, 4C)
    w_fp = wslab_ref[3 * C:7 * C, :C]                          # (4C, C)

    # ---- ln_1 + fused QKV projection (Q columns pre-scaled by 1/sqrt(hd)) ----
    h1 = _layer_norm(x, ln1w, ln1b)
    qkv = jnp.dot(h1, w_qkv, preferred_element_type=jnp.float32) + b_qkv   # (M, 128)

    # additive causal mask (finite), broadcast over the batch dim
    row = jax.lax.broadcasted_iota(jnp.int32, (T, T), 0)
    col = jax.lax.broadcasted_iota(jnp.int32, (T, T), 1)
    causal_bias = jnp.where(col <= row, 0.0, NEG_INF).reshape(1, T, T)

    # ---- attention: per-head loop, batched over the B items via 3-D einsums ----
    # Per-head outputs are folded straight into the output projection using
    # sublane-aligned row slices of w_attn (no lane concats, no y materialization).
    attn = jnp.zeros((M, C), jnp.float32)
    for h in range(N_HEAD):
        q0 = h * HEAD_DIM
        qh = qkv[:, q0:q0 + HEAD_DIM].reshape(B, T, HEAD_DIM)           # pre-scaled
        kh = qkv[:, C + q0:C + q0 + HEAD_DIM].reshape(B, T, HEAD_DIM)
        vh = qkv[:, 2 * C + q0:2 * C + q0 + HEAD_DIM].reshape(B, T, HEAD_DIM)

        att = jnp.einsum('bqd,bkd->bqk', qh, kh,
                         preferred_element_type=jnp.float32) + causal_bias
        att = att - jnp.max(att, axis=-1, keepdims=True)
        p = jnp.exp(att)
        d = jnp.sum(p, axis=-1, keepdims=True)
        r = pl.reciprocal(d, approx=True)                      # EUP slot
        r = r * (2.0 - d * r)                                  # one Newton step (d >= 1)
        yh = jnp.einsum('bqk,bkd->bqd', p * r, vh,
                        preferred_element_type=jnp.float32).reshape(M, HEAD_DIM)

        w_attn_h = wslab_ref[C + h * HEAD_DIM:C + (h + 1) * HEAD_DIM, :C]  # (hd, C) view
        attn = attn + jnp.dot(yh, w_attn_h, preferred_element_type=jnp.float32)
    attn = attn + b_attn

    # ---- residual + ln_2 + FFN (c_fc -> GELU -> c_proj) + residual ----
    h2 = _layer_norm(x + attn, ln2w, ln2b)
    u = jnp.dot(h2, w_fc, preferred_element_type=jnp.float32) + b_fc
    g = _gelu_exact(u)
    ffn = jnp.dot(g, w_fp, preferred_element_type=jnp.float32) + b_fp

    o_ref[...] = h2 + ffn


def pack_params(params):
    """One-time wrapper-side rewrite: fold 1/sqrt(head_dim) into the Q projection and
    coalesce the 13 parameter tensors into two lane-padded slabs (3 DMAs total)."""
    scale = 1.0 / math.sqrt(HEAD_DIM)
    w_qkv = params["w_qkv"].at[:, :C].multiply(scale)
    b_qkv = params["b_qkv"].at[:, :C].multiply(scale)

    wslab = jnp.zeros((W_ROWS, LANES), jnp.float32)
    wslab = wslab.at[0:C, 0:3 * C].set(w_qkv)
    wslab = wslab.at[C:2 * C, 0:C].set(params["w_attn_proj"])
    wslab = wslab.at[2 * C:3 * C, 0:4 * C].set(params["w_fc"])
    wslab = wslab.at[3 * C:7 * C, 0:C].set(params["w_ffn_proj"])

    bslab = jnp.zeros((8, LANES), jnp.float32)
    bslab = bslab.at[0, 0:C].set(params["ln1_w"][0])
    bslab = bslab.at[1, 0:C].set(params["ln1_b"][0])
    bslab = bslab.at[2, 0:3 * C].set(b_qkv[0])
    bslab = bslab.at[3, 0:C].set(params["b_attn_proj"][0])
    bslab = bslab.at[4, 0:C].set(params["ln2_w"][0])
    bslab = bslab.at[5, 0:C].set(params["ln2_b"][0])
    bslab = bslab.at[6, 0:4 * C].set(params["b_fc"][0])
    bslab = bslab.at[7, 0:C].set(params["b_ffn_proj"][0])
    return wslab, bslab


@jax.jit
def transformer_block(x, wslab, bslab):
    """x: (B, T, C) float32; wslab/bslab: packed parameter slabs from pack_params."""
    x2d = x.reshape(M, C)                       # free reshape in the wrapper
    vmem = pl.BlockSpec(memory_space=pltpu.MemorySpace.VMEM)
    out2d = pl.pallas_call(
        transformer_block_kernel,
        out_shape=jax.ShapeDtypeStruct((M, C), jnp.float32),
        in_specs=[vmem, vmem, vmem],            # whole arrays resident in VMEM, one step
        out_specs=vmem,
    )(x2d, wslab, bslab)
    return out2d.reshape(B, T, C)


def reference_block(x, p):
    """Pure-JAX reference mirroring the PyTorch forward (eval mode), unscaled params."""
    def ln(v, w, b):
        mu = jnp.mean(v, axis=-1, keepdims=True)
        var = jnp.mean((v - mu) ** 2, axis=-1, keepdims=True)
        return (v - mu) / jnp.sqrt(var + EPS) * w + b

    h1 = ln(x, p["ln1_w"][0], p["ln1_b"][0])
    qkv = h1 @ p["w_qkv"] + p["b_qkv"][0]
    q, k, v = jnp.split(qkv, 3, axis=-1)
    q = q.reshape(B, T, N_HEAD, HEAD_DIM).transpose(0, 2, 1, 3)
    k = k.reshape(B, T, N_HEAD, HEAD_DIM).transpose(0, 2, 1, 3)
    v = v.reshape(B, T, N_HEAD, HEAD_DIM).transpose(0, 2, 1, 3)
    att = (q @ k.transpose(0, 1, 3, 2)) / math.sqrt(HEAD_DIM)
    mask = jnp.tril(jnp.ones((T, T), bool))
    att = jnp.where(mask, att, -jnp.inf)
    att = jax.nn.softmax(att, axis=-1)
    y = (att @ v).transpose(0, 2, 1, 3).reshape(B, T, C)
    y = y @ p["w_attn_proj"] + p["b_attn_proj"][0]
    h2 = ln(x + y, p["ln2_w"][0], p["ln2_b"][0])
    u = h2 @ p["w_fc"] + p["b_fc"][0]
    g = 0.5 * u * (1.0 + jax.lax.erf(u / math.sqrt(2.0)))
    ffn = g @ p["w_ffn_proj"] + p["b_ffn_proj"][0]
    return h2 + ffn


def make_params(key):
    ks = jax.random.split(key, 6)
    n = lambda k, shape: (0.02 * jax.random.normal(k, shape)).astype(jnp.float32)
    return {
        "ln1_w": jnp.ones((1, C), jnp.float32),
        "ln1_b": jnp.zeros((1, C), jnp.float32),
        "w_qkv": n(ks[0], (C, 3 * C)),
        "b_qkv": n(ks[1], (1, 3 * C)),
        "w_attn_proj": n(ks[2], (C, C)),
        "b_attn_proj": jnp.zeros((1, C), jnp.float32),
        "ln2_w": jnp.ones((1, C), jnp.float32),
        "ln2_b": jnp.zeros((1, C), jnp.float32),
        "w_fc": n(ks[3], (C, 4 * C)),
        "b_fc": n(ks[4], (1, 4 * C)),
        "w_ffn_proj": n(ks[5], (4 * C, C)),
        "b_ffn_proj": jnp.zeros((1, C), jnp.float32),
    }


if __name__ == "__main__":
    key = jax.random.PRNGKey(0)
    kx, kp = jax.random.split(key)
    x = jax.random.normal(kx, (B, T, C), jnp.float32)
    params = make_params(kp)

    wslab, bslab = pack_params(params)           # one-time weight rewrite + slab packing
    out = transformer_block(x, wslab, bslab)
    out = jax.block_until_ready(out)

    ref = reference_block(x, params)
    np.testing.assert_allclose(np.asarray(out), np.asarray(ref), rtol=1e-4, atol=1e-4)

    print("KERNEL_OK")
</pallas_src>

<mosaic_0001>
module attributes {stable_mosaic.version = 11 : i64} {
  func.func @transformer_block_kernel(%arg0: memref<16x32xf32, #tpu.memory_space<vmem>>, %arg1: memref<224x128xf32, #tpu.memory_space<vmem>>, %arg2: memref<8x128xf32, #tpu.memory_space<vmem>>, %arg3: memref<16x32xf32, #tpu.memory_space<vmem>>) attributes {dimension_semantics = [], scalar_prefetch = 0 : i64, scratch_operands = 0 : i64, tpu.core_type = #tpu.core_type<tc>} {
    %c0 = arith.constant 0 : index
    %c0_0 = arith.constant 0 : index
    %0 = vector.load %arg0[%c0, %c0_0] : memref<16x32xf32, #tpu.memory_space<vmem>>, vector<16x32xf32>
    %c0_1 = arith.constant 0 : index
    %c0_2 = arith.constant 0 : index
    %1 = vector.load %arg2[%c0_1, %c0_2] : memref<8x128xf32, #tpu.memory_space<vmem>>, vector<1x32xf32>
    %c1 = arith.constant 1 : index
    %c0_3 = arith.constant 0 : index
    %2 = vector.load %arg2[%c1, %c0_3] : memref<8x128xf32, #tpu.memory_space<vmem>>, vector<1x32xf32>
    %c2 = arith.constant 2 : index
    %c0_4 = arith.constant 0 : index
    %3 = vector.load %arg2[%c2, %c0_4] : memref<8x128xf32, #tpu.memory_space<vmem>>, vector<1x128xf32>
    %c3 = arith.constant 3 : index
    %c0_5 = arith.constant 0 : index
    %4 = vector.load %arg2[%c3, %c0_5] : memref<8x128xf32, #tpu.memory_space<vmem>>, vector<1x32xf32>
    %c4 = arith.constant 4 : index
    %c0_6 = arith.constant 0 : index
    %5 = vector.load %arg2[%c4, %c0_6] : memref<8x128xf32, #tpu.memory_space<vmem>>, vector<1x32xf32>
    %c5 = arith.constant 5 : index
    %c0_7 = arith.constant 0 : index
    %6 = vector.load %arg2[%c5, %c0_7] : memref<8x128xf32, #tpu.memory_space<vmem>>, vector<1x32xf32>
    %c6 = arith.constant 6 : index
    %c0_8 = arith.constant 0 : index
    %7 = vector.load %arg2[%c6, %c0_8] : memref<8x128xf32, #tpu.memory_space<vmem>>, vector<1x128xf32>
    %c7 = arith.constant 7 : index
    %c0_9 = arith.constant 0 : index
    %8 = vector.load %arg2[%c7, %c0_9] : memref<8x128xf32, #tpu.memory_space<vmem>>, vector<1x32xf32>
    %c0_10 = arith.constant 0 : index
    %c0_11 = arith.constant 0 : index
    %9 = vector.load %arg1[%c0_10, %c0_11] : memref<224x128xf32, #tpu.memory_space<vmem>>, vector<32x128xf32>
    %c64 = arith.constant 64 : index
    %c0_12 = arith.constant 0 : index
    %10 = vector.load %arg1[%c64, %c0_12] : memref<224x128xf32, #tpu.memory_space<vmem>>, vector<32x128xf32>
    %c96 = arith.constant 96 : index
    %c0_13 = arith.constant 0 : index
    %11 = vector.load %arg1[%c96, %c0_13] : memref<224x128xf32, #tpu.memory_space<vmem>>, vector<128x32xf32>
    %cst = arith.constant dense<0.000000e+00> : vector<16xf32>
    %12 = vector.multi_reduction <add>, %0, %cst [1] : vector<16x32xf32> to vector<16xf32>
    %13 = vector.shape_cast %12 : vector<16xf32> to vector<16x1xf32>
    %cst_14 = arith.constant 3.200000e+01 : f32
    %14 = vector.broadcast %cst_14 : f32 to vector<16x1xf32>
    %15 = arith.divf %13, %14 : vector<16x1xf32>
    %16 = vector.broadcast %15 : vector<16x1xf32> to vector<16x32xf32>
    %17 = arith.subf %0, %16 : vector<16x32xf32>
    %18 = arith.mulf %17, %17 : vector<16x32xf32>
    %cst_15 = arith.constant dense<0.000000e+00> : vector<16xf32>
    %19 = vector.multi_reduction <add>, %18, %cst_15 [1] : vector<16x32xf32> to vector<16xf32>
    %20 = vector.shape_cast %19 : vector<16xf32> to vector<16x1xf32>
    %cst_16 = arith.constant 3.200000e+01 : f32
    %21 = vector.broadcast %cst_16 : f32 to vector<16x1xf32>
    %22 = arith.divf %20, %21 : vector<16x1xf32>
    %23 = vector.broadcast %15 : vector<16x1xf32> to vector<16x32xf32>
    %24 = arith.subf %0, %23 : vector<16x32xf32>
    %cst_17 = arith.constant 9.99999974E-6 : f32
    %25 = vector.broadcast %cst_17 : f32 to vector<16x1xf32>
    %26 = arith.addf %22, %25 : vector<16x1xf32>
    %27 = math.rsqrt %26 : vector<16x1xf32>
    %28 = vector.broadcast %27 : vector<16x1xf32> to vector<16x32xf32>
    %29 = arith.mulf %24, %28 : vector<16x32xf32>
    %30 = vector.broadcast %1 : vector<1x32xf32> to vector<16x32xf32>
    %31 = arith.mulf %29, %30 : vector<16x32xf32>
    %32 = vector.broadcast %2 : vector<1x32xf32> to vector<16x32xf32>
    %33 = arith.addf %31, %32 : vector<16x32xf32>
    %cst_18 = arith.constant dense<0.000000e+00> : vector<16x128xf32>
    %34 = tpu.matmul %33, %9, %cst_18 {dimension_numbers = #tpu.dot_dimension_numbers<[1], [0], [0], [1], [0, 0, 1, 1], [], []>} : vector<16x32xf32>, vector<32x128xf32>, vector<16x128xf32> -> vector<16x128xf32>
    %35 = vector.broadcast %3 : vector<1x128xf32> to vector<16x128xf32>
    %36 = arith.addf %34, %35 : vector<16x128xf32>
    %37 = tpu.iota {dimensions = array<i32: 0>} : vector<8x8xi32>
    %38 = tpu.iota {dimensions = array<i32: 1>} : vector<8x8xi32>
    %39 = arith.cmpi sle, %38, %37 : vector<8x8xi32>
    %cst_19 = arith.constant 0.000000e+00 : f32
    %cst_20 = arith.constant -1.000000e+30 : f32
    %40 = vector.broadcast %cst_19 : f32 to vector<8x8xf32>
    %41 = vector.broadcast %cst_20 : f32 to vector<8x8xf32>
    %42 = arith.select %39, %40, %41 : vector<8x8xi1>, vector<8x8xf32>
    %43 = vector.shape_cast %42 : vector<8x8xf32> to vector<1x8x8xf32>
    %cst_21 = arith.constant 0.000000e+00 : f32
    %44 = vector.broadcast %cst_21 : f32 to vector<16x32xf32>
    %45 = vector.extract_strided_slice %36 {offsets = [0, 0], sizes = [16, 8], strides = [1, 1]} : vector<16x128xf32> to vector<16x8xf32>
    %46 = vector.shape_cast %45 : vector<16x8xf32> to vector<2x8x8xf32>
    %47 = vector.extract_strided_slice %36 {offsets = [0, 32], sizes = [16, 8], strides = [1, 1]} : vector<16x128xf32> to vector<16x8xf32>
    %48 = vector.shape_cast %47 : vector<16x8xf32> to vector<2x8x8xf32>
    %49 = vector.extract_strided_slice %36 {offsets = [0, 64], sizes = [16, 8], strides = [1, 1]} : vector<16x128xf32> to vector<16x8xf32>
    %50 = vector.shape_cast %49 : vector<16x8xf32> to vector<2x8x8xf32>
    "tpu.trace_start"() <{level = 10 : i32, message = "bqd,bkd->bqk"}> : () -> ()
    %cst_22 = arith.constant dense<0.000000e+00> : vector<2x8x8xf32>
    %51 = tpu.matmul %46, %48, %cst_22 {dimension_numbers = #tpu.dot_dimension_numbers<[2], [2], [1], [1], [0, 0, 0, 1, 1, 1], [0], [0]>} : vector<2x8x8xf32>, vector<2x8x8xf32>, vector<2x8x8xf32> -> vector<2x8x8xf32>
    "tpu.trace_stop"() : () -> ()
    %52 = vector.broadcast %43 : vector<1x8x8xf32> to vector<2x8x8xf32>
    %53 = arith.addf %51, %52 : vector<2x8x8xf32>
    %cst_23 = arith.constant dense<0xFF800000> : vector<2x8xf32>
    %54 = vector.multi_reduction <maximumf>, %53, %cst_23 [2] : vector<2x8x8xf32> to vector<2x8xf32>
    %55 = vector.shape_cast %54 : vector<2x8xf32> to vector<2x8x1xf32>
    %56 = vector.broadcast %55 : vector<2x8x1xf32> to vector<2x8x8xf32>
    %57 = arith.subf %53, %56 : vector<2x8x8xf32>
    %58 = math.exp %57 : vector<2x8x8xf32>
    %cst_24 = arith.constant dense<0.000000e+00> : vector<2x8xf32>
    %59 = vector.multi_reduction <add>, %58, %cst_24 [2] : vector<2x8x8xf32> to vector<2x8xf32>
    %60 = vector.shape_cast %59 : vector<2x8xf32> to vector<2x8x1xf32>
    %61 = tpu.reciprocal %60 {approx = true} : vector<2x8x1xf32> -> vector<2x8x1xf32>
    %62 = arith.mulf %60, %61 : vector<2x8x1xf32>
    %cst_25 = arith.constant 2.000000e+00 : f32
    %63 = vector.broadcast %cst_25 : f32 to vector<2x8x1xf32>
    %64 = arith.subf %63, %62 : vector<2x8x1xf32>
    %65 = arith.mulf %61, %64 : vector<2x8x1xf32>
    %66 = vector.broadcast %65 : vector<2x8x1xf32> to vector<2x8x8xf32>
    %67 = arith.mulf %58, %66 : vector<2x8x8xf32>
    "tpu.trace_start"() <{level = 10 : i32, message = "bqk,bkd->bqd"}> : () -> ()
    %cst_26 = arith.constant dense<0.000000e+00> : vector<2x8x8xf32>
    %68 = tpu.matmul %67, %50, %cst_26 {dimension_numbers = #tpu.dot_dimension_numbers<[2], [1], [1], [2], [0, 0, 0, 1, 1, 2], [0], [0]>} : vector<2x8x8xf32>, vector<2x8x8xf32>, vector<2x8x8xf32> -> vector<2x8x8xf32>
    "tpu.trace_stop"() : () -> ()
    %69 = vector.shape_cast %68 : vector<2x8x8xf32> to vector<16x8xf32>
    %c32 = arith.constant 32 : index
    %c0_27 = arith.constant 0 : index
    %70 = vector.load %arg1[%c32, %c0_27] : memref<224x128xf32, #tpu.memory_space<vmem>>, vector<8x32xf32>
    %cst_28 = arith.constant dense<0.000000e+00> : vector<16x32xf32>
    %71 = tpu.matmul %69, %70, %cst_28 {dimension_numbers = #tpu.dot_dimension_numbers<[1], [0], [0], [1], [0, 0, 1, 1], [], []>} : vector<16x8xf32>, vector<8x32xf32>, vector<16x32xf32> -> vector<16x32xf32>
    %72 = arith.addf %44, %71 : vector<16x32xf32>
    %73 = vector.extract_strided_slice %36 {offsets = [0, 8], sizes = [16, 8], strides = [1, 1]} : vector<16x128xf32> to vector<16x8xf32>
    %74 = vector.shape_cast %73 : vector<16x8xf32> to vector<2x8x8xf32>
    %75 = vector.extract_strided_slice %36 {offsets = [0, 40], sizes = [16, 8], strides = [1, 1]} : vector<16x128xf32> to vector<16x8xf32>
    %76 = vector.shape_cast %75 : vector<16x8xf32> to vector<2x8x8xf32>
    %77 = vector.extract_strided_slice %36 {offsets = [0, 72], sizes = [16, 8], strides = [1, 1]} : vector<16x128xf32> to vector<16x8xf32>
    %78 = vector.shape_cast %77 : vector<16x8xf32> to vector<2x8x8xf32>
    "tpu.trace_start"() <{level = 10 : i32, message = "bqd,bkd->bqk"}> : () -> ()
    %cst_29 = arith.constant dense<0.000000e+00> : vector<2x8x8xf32>
    %79 = tpu.matmul %74, %76, %cst_29 {dimension_numbers = #tpu.dot_dimension_numbers<[2], [2], [1], [1], [0, 0, 0, 1, 1, 1], [0], [0]>} : vector<2x8x8xf32>, vector<2x8x8xf32>, vector<2x8x8xf32> -> vector<2x8x8xf32>
    "tpu.trace_stop"() : () -> ()
    %80 = vector.broadcast %43 : vector<1x8x8xf32> to vector<2x8x8xf32>
    %81 = arith.addf %79, %80 : vector<2x8x8xf32>
    %cst_30 = arith.constant dense<0xFF800000> : vector<2x8xf32>
    %82 = vector.multi_reduction <maximumf>, %81, %cst_30 [2] : vector<2x8x8xf32> to vector<2x8xf32>
    %83 = vector.shape_cast %82 : vector<2x8xf32> to vector<2x8x1xf32>
    %84 = vector.broadcast %83 : vector<2x8x1xf32> to vector<2x8x8xf32>
    %85 = arith.subf %81, %84 : vector<2x8x8xf32>
    %86 = math.exp %85 : vector<2x8x8xf32>
    %cst_31 = arith.constant dense<0.000000e+00> : vector<2x8xf32>
    %87 = vector.multi_reduction <add>, %86, %cst_31 [2] : vector<2x8x8xf32> to vector<2x8xf32>
    %88 = vector.shape_cast %87 : vector<2x8xf32> to vector<2x8x1xf32>
    %89 = tpu.reciprocal %88 {approx = true} : vector<2x8x1xf32> -> vector<2x8x1xf32>
    %90 = arith.mulf %88, %89 : vector<2x8x1xf32>
    %cst_32 = arith.constant 2.000000e+00 : f32
    %91 = vector.broadcast %cst_32 : f32 to vector<2x8x1xf32>
    %92 = arith.subf %91, %90 : vector<2x8x1xf32>
    %93 = arith.mulf %89, %92 : vector<2x8x1xf32>
    %94 = vector.broadcast %93 : vector<2x8x1xf32> to vector<2x8x8xf32>
    %95 = arith.mulf %86, %94 : vector<2x8x8xf32>
    "tpu.trace_start"() <{level = 10 : i32, message = "bqk,bkd->bqd"}> : () -> ()
    %cst_33 = arith.constant dense<0.000000e+00> : vector<2x8x8xf32>
    %96 = tpu.matmul %95, %78, %cst_33 {dimension_numbers = #tpu.dot_dimension_numbers<[2], [1], [1], [2], [0, 0, 0, 1, 1, 2], [0], [0]>} : vector<2x8x8xf32>, vector<2x8x8xf32>, vector<2x8x8xf32> -> vector<2x8x8xf32>
    "tpu.trace_stop"() : () -> ()
    %97 = vector.shape_cast %96 : vector<2x8x8xf32> to vector<16x8xf32>
    %c40 = arith.constant 40 : index
    %c0_34 = arith.constant 0 : index
    %98 = vector.load %arg1[%c40, %c0_34] : memref<224x128xf32, #tpu.memory_space<vmem>>, vector<8x32xf32>
    %cst_35 = arith.constant dense<0.000000e+00> : vector<16x32xf32>
    %99 = tpu.matmul %97, %98, %cst_35 {dimension_numbers = #tpu.dot_dimension_numbers<[1], [0], [0], [1], [0, 0, 1, 1], [], []>} : vector<16x8xf32>, vector<8x32xf32>, vector<16x32xf32> -> vector<16x32xf32>
    %100 = arith.addf %72, %99 : vector<16x32xf32>
    %101 = vector.extract_strided_slice %36 {offsets = [0, 16], sizes = [16, 8], strides = [1, 1]} : vector<16x128xf32> to vector<16x8xf32>
    %102 = vector.shape_cast %101 : vector<16x8xf32> to vector<2x8x8xf32>
    %103 = vector.extract_strided_slice %36 {offsets = [0, 48], sizes = [16, 8], strides = [1, 1]} : vector<16x128xf32> to vector<16x8xf32>
    %104 = vector.shape_cast %103 : vector<16x8xf32> to vector<2x8x8xf32>
    %105 = vector.extract_strided_slice %36 {offsets = [0, 80], sizes = [16, 8], strides = [1, 1]} : vector<16x128xf32> to vector<16x8xf32>
    %106 = vector.shape_cast %105 : vector<16x8xf32> to vector<2x8x8xf32>
    "tpu.trace_start"() <{level = 10 : i32, message = "bqd,bkd->bqk"}> : () -> ()
    %cst_36 = arith.constant dense<0.000000e+00> : vector<2x8x8xf32>
    %107 = tpu.matmul %102, %104, %cst_36 {dimension_numbers = #tpu.dot_dimension_numbers<[2], [2], [1], [1], [0, 0, 0, 1, 1, 1], [0], [0]>} : vector<2x8x8xf32>, vector<2x8x8xf32>, vector<2x8x8xf32> -> vector<2x8x8xf32>
    "tpu.trace_stop"() : () -> ()
    %108 = vector.broadcast %43 : vector<1x8x8xf32> to vector<2x8x8xf32>
    %109 = arith.addf %107, %108 : vector<2x8x8xf32>
    %cst_37 = arith.constant dense<0xFF800000> : vector<2x8xf32>
    %110 = vector.multi_reduction <maximumf>, %109, %cst_37 [2] : vector<2x8x8xf32> to vector<2x8xf32>
    %111 = vector.shape_cast %110 : vector<2x8xf32> to vector<2x8x1xf32>
    %112 = vector.broadcast %111 : vector<2x8x1xf32> to vector<2x8x8xf32>
    %113 = arith.subf %109, %112 : vector<2x8x8xf32>
    %114 = math.exp %113 : vector<2x8x8xf32>
    %cst_38 = arith.constant dense<0.000000e+00> : vector<2x8xf32>
    %115 = vector.multi_reduction <add>, %114, %cst_38 [2] : vector<2x8x8xf32> to vector<2x8xf32>
    %116 = vector.shape_cast %115 : vector<2x8xf32> to vector<2x8x1xf32>
    %117 = tpu.reciprocal %116 {approx = true} : vector<2x8x1xf32> -> vector<2x8x1xf32>
    %118 = arith.mulf %116, %117 : vector<2x8x1xf32>
    %cst_39 = arith.constant 2.000000e+00 : f32
    %119 = vector.broadcast %cst_39 : f32 to vector<2x8x1xf32>
    %120 = arith.subf %119, %118 : vector<2x8x1xf32>
    %121 = arith.mulf %117, %120 : vector<2x8x1xf32>
    %122 = vector.broadcast %121 : vector<2x8x1xf32> to vector<2x8x8xf32>
    %123 = arith.mulf %114, %122 : vector<2x8x8xf32>
    "tpu.trace_start"() <{level = 10 : i32, message = "bqk,bkd->bqd"}> : () -> ()
    %cst_40 = arith.constant dense<0.000000e+00> : vector<2x8x8xf32>
    %124 = tpu.matmul %123, %106, %cst_40 {dimension_numbers = #tpu.dot_dimension_numbers<[2], [1], [1], [2], [0, 0, 0, 1, 1, 2], [0], [0]>} : vector<2x8x8xf32>, vector<2x8x8xf32>, vector<2x8x8xf32> -> vector<2x8x8xf32>
    "tpu.trace_stop"() : () -> ()
    %125 = vector.shape_cast %124 : vector<2x8x8xf32> to vector<16x8xf32>
    %c48 = arith.constant 48 : index
    %c0_41 = arith.constant 0 : index
    %126 = vector.load %arg1[%c48, %c0_41] : memref<224x128xf32, #tpu.memory_space<vmem>>, vector<8x32xf32>
    %cst_42 = arith.constant dense<0.000000e+00> : vector<16x32xf32>
    %127 = tpu.matmul %125, %126, %cst_42 {dimension_numbers = #tpu.dot_dimension_numbers<[1], [0], [0], [1], [0, 0, 1, 1], [], []>} : vector<16x8xf32>, vector<8x32xf32>, vector<16x32xf32> -> vector<16x32xf32>
    %128 = arith.addf %100, %127 : vector<16x32xf32>
    %129 = vector.extract_strided_slice %36 {offsets = [0, 24], sizes = [16, 8], strides = [1, 1]} : vector<16x128xf32> to vector<16x8xf32>
    %130 = vector.shape_cast %129 : vector<16x8xf32> to vector<2x8x8xf32>
    %131 = vector.extract_strided_slice %36 {offsets = [0, 56], sizes = [16, 8], strides = [1, 1]} : vector<16x128xf32> to vector<16x8xf32>
    %132 = vector.shape_cast %131 : vector<16x8xf32> to vector<2x8x8xf32>
    %133 = vector.extract_strided_slice %36 {offsets = [0, 88], sizes = [16, 8], strides = [1, 1]} : vector<16x128xf32> to vector<16x8xf32>
    %134 = vector.shape_cast %133 : vector<16x8xf32> to vector<2x8x8xf32>
    "tpu.trace_start"() <{level = 10 : i32, message = "bqd,bkd->bqk"}> : () -> ()
    %cst_43 = arith.constant dense<0.000000e+00> : vector<2x8x8xf32>
    %135 = tpu.matmul %130, %132, %cst_43 {dimension_numbers = #tpu.dot_dimension_numbers<[2], [2], [1], [1], [0, 0, 0, 1, 1, 1], [0], [0]>} : vector<2x8x8xf32>, vector<2x8x8xf32>, vector<2x8x8xf32> -> vector<2x8x8xf32>
    "tpu.trace_stop"() : () -> ()
    %136 = vector.broadcast %43 : vector<1x8x8xf32> to vector<2x8x8xf32>
    %137 = arith.addf %135, %136 : vector<2x8x8xf32>
    %cst_44 = arith.constant dense<0xFF800000> : vector<2x8xf32>
    %138 = vector.multi_reduction <maximumf>, %137, %cst_44 [2] : vector<2x8x8xf32> to vector<2x8xf32>
    %139 = vector.shape_cast %138 : vector<2x8xf32> to vector<2x8x1xf32>
    %140 = vector.broadcast %139 : vector<2x8x1xf32> to vector<2x8x8xf32>
    %141 = arith.subf %137, %140 : vector<2x8x8xf32>
    %142 = math.exp %141 : vector<2x8x8xf32>
    %cst_45 = arith.constant dense<0.000000e+00> : vector<2x8xf32>
    %143 = vector.multi_reduction <add>, %142, %cst_45 [2] : vector<2x8x8xf32> to vector<2x8xf32>
    %144 = vector.shape_cast %143 : vector<2x8xf32> to vector<2x8x1xf32>
    %145 = tpu.reciprocal %144 {approx = true} : vector<2x8x1xf32> -> vector<2x8x1xf32>
    %146 = arith.mulf %144, %145 : vector<2x8x1xf32>
    %cst_46 = arith.constant 2.000000e+00 : f32
    %147 = vector.broadcast %cst_46 : f32 to vector<2x8x1xf32>
    %148 = arith.subf %147, %146 : vector<2x8x1xf32>
    %149 = arith.mulf %145, %148 : vector<2x8x1xf32>
    %150 = vector.broadcast %149 : vector<2x8x1xf32> to vector<2x8x8xf32>
    %151 = arith.mulf %142, %150 : vector<2x8x8xf32>
    "tpu.trace_start"() <{level = 10 : i32, message = "bqk,bkd->bqd"}> : () -> ()
    %cst_47 = arith.constant dense<0.000000e+00> : vector<2x8x8xf32>
    %152 = tpu.matmul %151, %134, %cst_47 {dimension_numbers = #tpu.dot_dimension_numbers<[2], [1], [1], [2], [0, 0, 0, 1, 1, 2], [0], [0]>} : vector<2x8x8xf32>, vector<2x8x8xf32>, vector<2x8x8xf32> -> vector<2x8x8xf32>
    "tpu.trace_stop"() : () -> ()
    %153 = vector.shape_cast %152 : vector<2x8x8xf32> to vector<16x8xf32>
    %c56 = arith.constant 56 : index
    %c0_48 = arith.constant 0 : index
    %154 = vector.load %arg1[%c56, %c0_48] : memref<224x128xf32, #tpu.memory_space<vmem>>, vector<8x32xf32>
    %cst_49 = arith.constant dense<0.000000e+00> : vector<16x32xf32>
    %155 = tpu.matmul %153, %154, %cst_49 {dimension_numbers = #tpu.dot_dimension_numbers<[1], [0], [0], [1], [0, 0, 1, 1], [], []>} : vector<16x8xf32>, vector<8x32xf32>, vector<16x32xf32> -> vector<16x32xf32>
    %156 = arith.addf %128, %155 : vector<16x32xf32>
    %157 = vector.broadcast %4 : vector<1x32xf32> to vector<16x32xf32>
    %158 = arith.addf %156, %157 : vector<16x32xf32>
    %159 = arith.addf %0, %158 : vector<16x32xf32>
    %cst_50 = arith.constant dense<0.000000e+00> : vector<16xf32>
    %160 = vector.multi_reduction <add>, %159, %cst_50 [1] : vector<16x32xf32> to vector<16xf32>
    %161 = vector.shape_cast %160 : vector<16xf32> to vector<16x1xf32>
    %cst_51 = arith.constant 3.200000e+01 : f32
    %162 = vector.broadcast %cst_51 : f32 to vector<16x1xf32>
    %163 = arith.divf %161, %162 : vector<16x1xf32>
    %164 = vector.broadcast %163 : vector<16x1xf32> to vector<16x32xf32>
    %165 = arith.subf %159, %164 : vector<16x32xf32>
    %166 = arith.mulf %165, %165 : vector<16x32xf32>
    %cst_52 = arith.constant dense<0.000000e+00> : vector<16xf32>
    %167 = vector.multi_reduction <add>, %166, %cst_52 [1] : vector<16x32xf32> to vector<16xf32>
    %168 = vector.shape_cast %167 : vector<16xf32> to vector<16x1xf32>
    %cst_53 = arith.constant 3.200000e+01 : f32
    %169 = vector.broadcast %cst_53 : f32 to vector<16x1xf32>
    %170 = arith.divf %168, %169 : vector<16x1xf32>
    %171 = vector.broadcast %163 : vector<16x1xf32> to vector<16x32xf32>
    %172 = arith.subf %159, %171 : vector<16x32xf32>
    %cst_54 = arith.constant 9.99999974E-6 : f32
    %173 = vector.broadcast %cst_54 : f32 to vector<16x1xf32>
    %174 = arith.addf %170, %173 : vector<16x1xf32>
    %175 = math.rsqrt %174 : vector<16x1xf32>
    %176 = vector.broadcast %175 : vector<16x1xf32> to vector<16x32xf32>
    %177 = arith.mulf %172, %176 : vector<16x32xf32>
    %178 = vector.broadcast %5 : vector<1x32xf32> to vector<16x32xf32>
    %179 = arith.mulf %177, %178 : vector<16x32xf32>
    %180 = vector.broadcast %6 : vector<1x32xf32> to vector<16x32xf32>
    %181 = arith.addf %179, %180 : vector<16x32xf32>
    %cst_55 = arith.constant dense<0.000000e+00> : vector<16x128xf32>
    %182 = tpu.matmul %181, %10, %cst_55 {dimension_numbers = #tpu.dot_dimension_numbers<[1], [0], [0], [1], [0, 0, 1, 1], [], []>} : vector<16x32xf32>, vector<32x128xf32>, vector<16x128xf32> -> vector<16x128xf32>
    %183 = vector.broadcast %7 : vector<1x128xf32> to vector<16x128xf32>
    %184 = arith.addf %182, %183 : vector<16x128xf32>
    %cst_56 = arith.constant 5.000000e-01 : f32
    %185 = vector.broadcast %cst_56 : f32 to vector<16x128xf32>
    %186 = arith.mulf %185, %184 : vector<16x128xf32>
    %cst_57 = arith.constant 0.707106769 : f32
    %187 = vector.broadcast %cst_57 : f32 to vector<16x128xf32>
    %188 = arith.mulf %184, %187 : vector<16x128xf32>
    %cst_58 = arith.constant 0.000000e+00 : f32
    %189 = vector.broadcast %cst_58 : f32 to vector<16x128xf32>
    %190 = arith.cmpf oge, %188, %189 : vector<16x128xf32>
    %cst_59 = arith.constant 1.000000e+00 : f32
    %cst_60 = arith.constant -1.000000e+00 : f32
    %191 = vector.broadcast %cst_59 : f32 to vector<16x128xf32>
    %192 = vector.broadcast %cst_60 : f32 to vector<16x128xf32>
    %193 = arith.select %190, %191, %192 : vector<16x128xi1>, vector<16x128xf32>
    %194 = math.absf %188 : vector<16x128xf32>
    %cst_61 = arith.constant 0.327591091 : f32
    %195 = vector.broadcast %cst_61 : f32 to vector<16x128xf32>
    %196 = arith.mulf %195, %194 : vector<16x128xf32>
    %cst_62 = arith.constant 1.000000e+00 : f32
    %197 = vector.broadcast %cst_62 : f32 to vector<16x128xf32>
    %198 = arith.addf %197, %196 : vector<16x128xf32>
    %cst_63 = arith.constant 1.000000e+00 : f32
    %199 = vector.broadcast %cst_63 : f32 to vector<16x128xf32>
    %200 = arith.divf %199, %198 : vector<16x128xf32>
    %cst_64 = arith.constant 1.06140542 : f32
    %201 = vector.broadcast %cst_64 : f32 to vector<16x128xf32>
    %202 = arith.mulf %201, %200 : vector<16x128xf32>
    %cst_65 = arith.constant -1.45315206 : f32
    %203 = vector.broadcast %cst_65 : f32 to vector<16x128xf32>
    %204 = arith.addf %202, %203 : vector<16x128xf32>
    %205 = arith.mulf %204, %200 : vector<16x128xf32>
    %cst_66 = arith.constant 1.42141378 : f32
    %206 = vector.broadcast %cst_66 : f32 to vector<16x128xf32>
    %207 = arith.addf %205, %206 : vector<16x128xf32>
    %208 = arith.mulf %207, %200 : vector<16x128xf32>
    %cst_67 = arith.constant -0.284496725 : f32
    %209 = vector.broadcast %cst_67 : f32 to vector<16x128xf32>
    %210 = arith.addf %208, %209 : vector<16x128xf32>
    %211 = arith.mulf %210, %200 : vector<16x128xf32>
    %cst_68 = arith.constant 0.254829586 : f32
    %212 = vector.broadcast %cst_68 : f32 to vector<16x128xf32>
    %213 = arith.addf %211, %212 : vector<16x128xf32>
    %214 = arith.mulf %213, %200 : vector<16x128xf32>
    %cst_69 = arith.constant 0.000000e+00 : f32
    %215 = vector.broadcast %cst_69 : f32 to vector<16x128xf32>
    %216 = arith.subf %215, %194 : vector<16x128xf32>
    %217 = arith.mulf %216, %194 : vector<16x128xf32>
    %218 = math.exp %217 : vector<16x128xf32>
    %219 = arith.mulf %214, %218 : vector<16x128xf32>
    %cst_70 = arith.constant 1.000000e+00 : f32
    %220 = vector.broadcast %cst_70 : f32 to vector<16x128xf32>
    %221 = arith.subf %220, %219 : vector<16x128xf32>
    %222 = arith.mulf %193, %221 : vector<16x128xf32>
    %cst_71 = arith.constant 1.000000e+00 : f32
    %223 = vector.broadcast %cst_71 : f32 to vector<16x128xf32>
    %224 = arith.addf %223, %222 : vector<16x128xf32>
    %225 = arith.mulf %186, %224 : vector<16x128xf32>
    %cst_72 = arith.constant dense<0.000000e+00> : vector<16x32xf32>
    %226 = tpu.matmul %225, %11, %cst_72 {dimension_numbers = #tpu.dot_dimension_numbers<[1], [0], [0], [1], [0, 0, 1, 1], [], []>} : vector<16x128xf32>, vector<128x32xf32>, vector<16x32xf32> -> vector<16x32xf32>
    %227 = vector.broadcast %8 : vector<1x32xf32> to vector<16x32xf32>
    %228 = arith.addf %226, %227 : vector<16x32xf32>
    %229 = arith.addf %181, %228 : vector<16x32xf32>
    %c0_73 = arith.constant 0 : index
    %c0_74 = arith.constant 0 : index
    %230 = vector.load %arg3[%c0_73, %c0_74] : memref<16x32xf32, #tpu.memory_space<vmem>>, vector<16x32xf32>
    tpu.vector_store %arg3[%c0_73, %c0_74], %229 {strides = array<i32>} : memref<16x32xf32, #tpu.memory_space<vmem>>, vector<16x32xf32>,
    return
  }
}

</mosaic_0001>

<llo_original>
// kernel: transformer_block.1
$region0: #{transformer_block.1}
  #allocation0 [shape = 'u32[]', space=smem, size = 0x4, offset = 0x4, fixed_abs, tag = 'smem constant byte address 0x4 - core index']
  #allocation1 [shape = 'u32[144,128]{1,0:T(1,128)}', space=vmem, size = 0x12000, scoped, tag = 'internal scratch']
  %s0 = inlined_call_operand.hbm [shape: f32[16,32], index: 0, kind: input, shape index: {}]
  %s1 = inlined_call_operand.hbm [shape: f32[224,128], index: 1, kind: input, shape index: {}]
  %s2 = inlined_call_operand.vmem [shape: f32[8,128], index: 2, kind: input, shape index: {}]
  %s3 = inlined_call_operand.hbm [shape: f32[16,32], index: 3, kind: output, shape index: {}]
  %s4 = sld [smem:[#allocation0]]
  $region30: #{transformer_block.1} parent=0
    _
  %s6 = ssub.s32 1, %s4
  %s7 = scalar_select 0, %s6, %s4
  $region1: #{transformer_block.1} parent=0
    #allocation2 [shape = 'u8[8192]{0}', space=vmem, size = 0x2000, scoped, tag = 'input window, operand 0, single buffered']
    #allocation3 [shape = 's32[1]{0}', space=sflag, size = 0x4, scoped, tag = 'scoped memory for transformer_block.1']
    #allocation4 [shape = 's32[1]{0}', space=sflag, size = 0x4, scoped, tag = 'scoped memory for transformer_block.1']
    #allocation5 [shape = 'u8[114688]{0}', space=vmem, size = 0x1c000, scoped, tag = 'input window, operand 1, single buffered']
    #allocation6 [shape = 's32[1]{0}', space=sflag, size = 0x4, scoped, tag = 'scoped memory for transformer_block.1']
    #allocation7 [shape = 'u8[8192]{0}', space=vmem, size = 0x2000, scoped, tag = 'output window, operand 0, single buffered']
    %8 = vsyncpa [#allocation3], 0
    %9 = vsyncpa [#allocation6], 0
    %10 = vsyncpa [#allocation4], 0
    // Predicated region
    $region2: #{transformer_block.1} parent=1 // pred_check
      _
    $region3: #{transformer_block.1} parent=1 // pred_check_branch
      %12 = sbr.rel (0) target = $region5
    $region4: #{transformer_block.1} parent=1 // pred_region
      %s14 = ssub.s32 256, 256
      %15 = vsyncadd [#allocation3], %s14
      %s16 = sshll.u32 [#allocation2], 4
      %s17 = int_to_ptr.vmem [resolvable:$true] %s16
      %22 = dma.hbm_to_vmem [thread:$0]  %s0, 256, %s17, [#allocation3], 128, 128, 8
    $region5: #{transformer_block.1} parent=1 // pred_fallthru
      _
    // Predicated region
    $region6: #{transformer_block.1} parent=1 // pred_check
      _
    $region7: #{transformer_block.1} parent=1 // pred_check_branch
      %24 = sbr.rel (0) target = $region9
    $region8: #{transformer_block.1} parent=1 // pred_region
      %s26 = ssub.s32 3584, 3584
      %27 = vsyncadd [#allocation6], %s26
      %s28 = sshll.u32 [#allocation5], 4
      %s29 = int_to_ptr.vmem [resolvable:$true] %s28
      %34 = dma.hbm_to_vmem [thread:$0]  %s1, 3584, %s29, [#allocation6], 128, 128, 8
    $region9: #{transformer_block.1} parent=1 // pred_fallthru
      _
    // Predicated region
    $region10: #{transformer_block.1} parent=1 // pred_check
      _
    $region11: #{transformer_block.1} parent=1 // pred_check_branch
      %36 = sbr.rel (0) target = $region13
    $region12: #{transformer_block.1} parent=1 // pred_region
      _
    $region13: #{transformer_block.1} parent=1 // pred_fallthru
      _
    // Predicated region
    $region14: #{transformer_block.1} parent=1 // pred_check
      _
    $region15: #{transformer_block.1} parent=1 // pred_check_branch
      %38 = sbr.rel (0) target = $region17
    $region16: #{transformer_block.1} parent=1 // pred_region
      %39 = dma.done [#allocation3], 256
    $region17: #{transformer_block.1} parent=1 // pred_fallthru
      _
    // Predicated region
    $region18: #{transformer_block.1} parent=1 // pred_check
      _
    $region19: #{transformer_block.1} parent=1 // pred_check_branch
      %41 = sbr.rel (0) target = $region21
    $region20: #{transformer_block.1} parent=1 // pred_region
      %42 = dma.done [#allocation6], 3584
    $region21: #{transformer_block.1} parent=1 // pred_fallthru
      _
    %v43 = vld [vmem:[#allocation2] sm:$0xff]
    %v44 = vld [vmem:[#allocation2 + $0x8] sm:$0xff]
    %v45 = vld [vmem:[%s2] sm:$0x1]
    %v46 = vld [vmem:[%s2 + $0x1] sm:$0x1]
    %v47 = vld [vmem:[%s2 + $0x2] sm:$0x1]
    %v48 = vld [vmem:[%s2 + $0x3] sm:$0x1]
    %v49 = vld [vmem:[%s2 + $0x4] sm:$0x1]
    %v50 = vld [vmem:[%s2 + $0x5] sm:$0x1]
    %v51 = vld [vmem:[%s2 + $0x6] sm:$0x1]
    %v52 = vld [vmem:[%s2 + $0x7] sm:$0x1]
    %v53 = vld [vmem:[#allocation5] sm:$0xff]
    %v54 = vld [vmem:[#allocation5 + $0x8] sm:$0xff]
    %v55 = vld [vmem:[#allocation5 + $0x10] sm:$0xff]
    %v56 = vld [vmem:[#allocation5 + $0x18] sm:$0xff]
    %v57 = vld [vmem:[#allocation5 + $0x40] sm:$0xff]
    %v58 = vld [vmem:[#allocation5 + $0x48] sm:$0xff]
    %v59 = vld [vmem:[#allocation5 + $0x50] sm:$0xff]
    %v60 = vld [vmem:[#allocation5 + $0x58] sm:$0xff]
    %v61 = vld [vmem:[#allocation5 + $0x60] sm:$0xff]
    %v62 = vld [vmem:[#allocation5 + $0x68] sm:$0xff]
    %v63 = vld [vmem:[#allocation5 + $0x70] sm:$0xff]
    %v64 = vld [vmem:[#allocation5 + $0x78] sm:$0xff]
    %v65 = vld [vmem:[#allocation5 + $0x80] sm:$0xff]
    %v66 = vld [vmem:[#allocation5 + $0x88] sm:$0xff]
    %v67 = vld [vmem:[#allocation5 + $0x90] sm:$0xff]
    %v68 = vld [vmem:[#allocation5 + $0x98] sm:$0xff]
    %v69 = vld [vmem:[#allocation5 + $0xa0] sm:$0xff]
    %v70 = vld [vmem:[#allocation5 + $0xa8] sm:$0xff]
    %v71 = vld [vmem:[#allocation5 + $0xb0] sm:$0xff]
    %v72 = vld [vmem:[#allocation5 + $0xb8] sm:$0xff]
    %v73 = vld [vmem:[#allocation5 + $0xc0] sm:$0xff]
    %v74 = vld [vmem:[#allocation5 + $0xc8] sm:$0xff]
    %v75 = vld [vmem:[#allocation5 + $0xd0] sm:$0xff]
    %v76 = vld [vmem:[#allocation5 + $0xd8] sm:$0xff]
    %vm77 = vcmask 261120
    %v78 = vsel %vm77, %v43, 0.0
    %79 = vadd.xlane.f32.xlu0 %v78
    %v80 = vpop.xlane.xlu0 %79
    %v81 = vsel %vm77, %v44, 0.0
    %82 = vadd.xlane.f32.xlu0 %v81
    %v83 = vpop.xlane.xlu0 %82
    %v84 = vrcp.pop 32.0
    %v85 = vmul.f32 %v80, %v84
    %v86 = vmul.f32 %v83, %v84
    %v87 = vsub.f32 %v43, %v85
    %v88 = vsub.f32 %v44, %v86
    %v89 = vmul.f32 %v87, %v87
    %v90 = vmul.f32 %v88, %v88
    %v91 = vsel %vm77, %v89, 0.0
    %92 = vadd.xlane.f32.xlu0 %v91
    %v93 = vpop.xlane.xlu0 %92
    %v94 = vsel %vm77, %v90, 0.0
    %95 = vadd.xlane.f32.xlu0 %v94
    %v96 = vpop.xlane.xlu0 %95
    %v97 = vmul.f32 %v93, %v84
    %v98 = vmul.f32 %v96, %v84
    %v99 = vadd.f32 %v97, 1e-05
    %v100 = vadd.f32 %v98, 1e-05
    %v101 = vrsqrt.pop %v99
    %v102 = vrsqrt.pop %v100
    %v103 = vmul.f32 %v87, %v101
    %v104 = vmul.f32 %v88, %v102
    %v105 = vlaneseq
    %v106 = vshrl.u32 %v105, 7
    %v107 = vsub.s32 0, %v106
    %v108 = vrot.slane %v45, %v107
    %v109 = vmul.f32 %v103, %v108
    %v110 = vmul.f32 %v104, %v108
    %v111 = vlaneseq
    %v112 = vshrl.u32 %v111, 7
    %v113 = vsub.s32 0, %v112
    %v114 = vrot.slane %v46, %v113
    %v115 = vadd.f32 %v109, %v114
    %v116 = vadd.f32 %v110, %v114
    %v117 = vlaneseq
    %v118 = vshrl.u32 %v117, 7
    %v119 = vsub.s32 0, %v118
    %v120 = vrot.slane %v47, %v119
    %v122 = vsel %vm77, %v115, 0
    %v125 = vsel %vm77, %v116, 0
    %127 = vmatprep.subr.mxu0 0.0
    %128 = vmatpush1.msra.mxu0 %v53
    %129 = vmatprep.subr.mxu0 0.0
    %130 = vmatpush1.msra.mxu0 %v54
    %131 = vmatprep.subr.mxu0 0.0
    %132 = vmatpush1.msra.mxu0 %v55
    %133 = vmatprep.subr.mxu0 0.0
    %134 = vmatpush1.msra.mxu0 %v56
    %135 = vmatprep.subr.mxu0 0.0
    %136 = vmatpush1.msra.mxu0 0.0
    %137 = vmatprep.subr.mxu0 0.0
    %138 = vmatpush1.msra.mxu0 0.0
    %139 = vmatprep.subr.mxu0 0.0
    %140 = vmatpush1.msra.mxu0 0.0
    %141 = vmatprep.subr.mxu0 0.0
    %142 = vmatpush1.msra.mxu0 0.0
    %143 = vmatprep.subr.mxu0 0.0
    %144 = vmatpush1.msra.mxu0 0.0
    %145 = vmatprep.subr.mxu0 0.0
    %146 = vmatpush1.msra.mxu0 0.0
    %147 = vmatprep.subr.mxu0 0.0
    %148 = vmatpush1.msra.mxu0 0.0
    %149 = vmatprep.subr.mxu0 0.0
    %150 = vmatpush1.msra.mxu0 0.0
    %151 = vmatprep.subr.mxu0 0.0
    %152 = vmatpush1.msra.mxu0 0.0
    %153 = vmatprep.subr.mxu0 0.0
    %154 = vmatpush1.msra.mxu0 0.0
    %155 = vmatprep.subr.mxu0 0.0
    %156 = vmatpush1.msra.mxu0 0.0
    %157 = vmatprep.subr.mxu0 0.0
    %158 = vmatpush1.msra.mxu0 0.0
    %159 = vmatprep.subr.mxu0 0.0
    %160 = vmatpush1.msra.mxu0 0.0
    %161 = vmatprep.subr.mxu0 0.0
    %162 = vmatpush1.msra.mxu0 0.0
    %163 = vmatprep.subr.mxu0 0.0
    %164 = vmatpush1.msra.mxu0 0.0
    %165 = vmatprep.subr.mxu0 0.0
    %166 = vmatpush1.msra.mxu0 0.0
    %167 = vmatprep.subr.mxu0 0.0
    %168 = vmatpush1.msra.mxu0 0.0
    %169 = vmatprep.subr.mxu0 0.0
    %170 = vmatpush1.msra.mxu0 0.0
    %171 = vmatprep.subr.mxu0 0.0
    %172 = vmatpush1.msra.mxu0 0.0
    %173 = vmatprep.subr.mxu0 0.0
    %174 = vmatpush1.msra.mxu0 0.0
    %175 = vmatprep.subr.mxu0 0.0
    %176 = vmatpush1.msra.mxu0 0.0
    %177 = vmatprep.subr.mxu0 0.0
    %178 = vmatpush1.msra.mxu0 0.0
    %179 = vmatprep.subr.mxu0 0.0
    %180 = vmatpush1.msra.mxu0 0.0
    %181 = vmatprep.subr.mxu0 0.0
    %182 = vmatpush1.msra.mxu0 0.0
    %183 = vmatprep.subr.mxu0 0.0
    %184 = vmatpush1.msra.mxu0 0.0
    %185 = vmatprep.subr.mxu0 0.0
    %186 = vmatpush1.msra.mxu0 0.0
    %187 = vmatprep.subr.mxu0 0.0
    %188 = vmatpush1.msra.mxu0 0.0
    %189 = vmatprep.subr.mxu0 0.0
    %190 = vmatpush1.msra.mxu0 0.0
    %191 = vmatprep.mubr.f32.mxu0 0.0
    %192 = vmatmul.mubr.f32.gmra.mrb[0].mxu0 %v122
    %v193 = vpop.f32.mrb[0].mxu0
    %v194 = vadd.f32 %v120, %v193
    %v195 = vpop.f32.mrb[0].mxu0
    %196 = vmatprep.mubr.f32.mxu0 0.0
    %197 = vmatmul.mubr.f32.gmra.mrb[0].mxu0 %v125
    %v198 = vpop.f32.mrb[0].mxu0
    %v199 = vadd.f32 %v120, %v198
    %v200 = vpop.f32.mrb[0].mxu0
    %201 = vdwg.mxu0
    %v202 = vlaneseq
    %v203 = vshrl.u32 %v202, 7
    %v204 = vlaneseq
    %v205 = vand.u32 %v204, 127
    %vm206 = vcmp.le.s32.totalorder %v205, %v203
    %v207 = vsel %vm206, 0.0, -1e+30
    %209 = vrot.lane.b32.xlu0 %v194, 96
    %v210 = vpop.permute.xlu0 %209
    %vm211 = vcmask 64512
    %v212 = vsel %vm211, %v194, 0
    %v214 = vsel %vm211, %v210, 0
    %216 = vmatprep.subr.mxu0 0.0
    %217 = vmatpush1.xpose.msra.mxu0 %v214
    %218 = vmatprep.subr.mxu0 0.0
    %219 = vmatpush1.xpose.msra.mxu0 0.0
    %220 = vmatprep.subr.mxu0 0.0
    %221 = vmatpush1.xpose.msra.mxu0 0.0
    %222 = vmatprep.subr.mxu0 0.0
    %223 = vmatpush1.xpose.msra.mxu0 0.0
    %224 = vmatprep.subr.mxu0 0.0
    %225 = vmatpush1.xpose.msra.mxu0 0.0
    %226 = vmatprep.subr.mxu0 0.0
    %227 = vmatpush1.xpose.msra.mxu0 0.0
    %228 = vmatprep.subr.mxu0 0.0
    %229 = vmatpush1.xpose.msra.mxu0 0.0
    %230 = vmatprep.subr.mxu0 0.0
    %231 = vmatpush1.xpose.msra.mxu0 0.0
    %232 = vmatprep.subr.mxu0 0.0
    %233 = vmatpush1.xpose.msra.mxu0 0.0
    %234 = vmatprep.subr.mxu0 0.0
    %235 = vmatpush1.xpose.msra.mxu0 0.0
    %236 = vmatprep.subr.mxu0 0.0
    %237 = vmatpush1.xpose.msra.mxu0 0.0
    %238 = vmatprep.subr.mxu0 0.0
    %239 = vmatpush1.xpose.msra.mxu0 0.0
    %240 = vmatprep.subr.mxu0 0.0
    %241 = vmatpush1.xpose.msra.mxu0 0.0
    %242 = vmatprep.subr.mxu0 0.0
    %243 = vmatpush1.xpose.msra.mxu0 0.0
    %244 = vmatprep.subr.mxu0 0.0
    %245 = vmatpush1.xpose.msra.mxu0 0.0
    %246 = vmatprep.subr.mxu0 0.0
    %247 = vmatpush1.xpose.msra.mxu0 0.0
    %248 = vmatprep.subr.mxu0 0.0
    %249 = vmatpush1.xpose.msra.mxu0 0.0
    %250 = vmatprep.subr.mxu0 0.0
    %251 = vmatpush1.xpose.msra.mxu0 0.0
    %252 = vmatprep.subr.mxu0 0.0
    %253 = vmatpush1.xpose.msra.mxu0 0.0
    %254 = vmatprep.subr.mxu0 0.0
    %255 = vmatpush1.xpose.msra.mxu0 0.0
    %256 = vmatprep.subr.mxu0 0.0
    %257 = vmatpush1.xpose.msra.mxu0 0.0
    %258 = vmatprep.subr.mxu0 0.0
    %259 = vmatpush1.xpose.msra.mxu0 0.0
    %260 = vmatprep.subr.mxu0 0.0
    %261 = vmatpush1.xpose.msra.mxu0 0.0
    %262 = vmatprep.subr.mxu0 0.0
    %263 = vmatpush1.xpose.msra.mxu0 0.0
    %264 = vmatprep.subr.mxu0 0.0
    %265 = vmatpush1.xpose.msra.mxu0 0.0
    %266 = vmatprep.subr.mxu0 0.0
    %267 = vmatpush1.xpose.msra.mxu0 0.0
    %268 = vmatprep.subr.mxu0 0.0
    %269 = vmatpush1.xpose.msra.mxu0 0.0
    %270 = vmatprep.subr.mxu0 0.0
    %271 = vmatpush1.xpose.msra.mxu0 0.0
    %272 = vmatprep.subr.mxu0 0.0
    %273 = vmatpush1.xpose.msra.mxu0 0.0
    %274 = vmatprep.subr.mxu0 0.0
    %275 = vmatpush1.xpose.msra.mxu0 0.0
    %276 = vmatprep.subr.mxu0 0.0
    %277 = vmatpush1.xpose.msra.mxu0 0.0
    %278 = vmatprep.subr.mxu0 0.0
    %279 = vmatpush1.xpose.msra.mxu0 0.0
    %280 = vmatprep.mubr.f32.mxu0 0.0
    %281 = vmatmul.mubr.f32.gmra.mrb[0].mxu0 %v212
    %v282 = vpop.f32.mrb[0].mxu0
    %v283 = vadd.f32 %v207, %v282
    %v284 = vpop.f32.mrb[0].mxu0
    %285 = vdwg.mxu0
    %287 = vrot.lane.b32.xlu0 %v199, 96
    %v288 = vpop.permute.xlu0 %287
    %v289 = vsel %vm211, %v199, 0
    %v291 = vsel %vm211, %v288, 0
    %293 = vmatprep.subr.mxu0 0.0
    %294 = vmatpush1.xpose.msra.mxu0 %v291
    %295 = vmatprep.subr.mxu0 0.0
    %296 = vmatpush1.xpose.msra.mxu0 0.0
    %297 = vmatprep.subr.mxu0 0.0
    %298 = vmatpush1.xpose.msra.mxu0 0.0
    %299 = vmatprep.subr.mxu0 0.0
    %300 = vmatpush1.xpose.msra.mxu0 0.0
    %301 = vmatprep.subr.mxu0 0.0
    %302 = vmatpush1.xpose.msra.mxu0 0.0
    %303 = vmatprep.subr.mxu0 0.0
    %304 = vmatpush1.xpose.msra.mxu0 0.0
    %305 = vmatprep.subr.mxu0 0.0
    %306 = vmatpush1.xpose.msra.mxu0 0.0
    %307 = vmatprep.subr.mxu0 0.0
    %308 = vmatpush1.xpose.msra.mxu0 0.0
    %309 = vmatprep.subr.mxu0 0.0
    %310 = vmatpush1.xpose.msra.mxu0 0.0
    %311 = vmatprep.subr.mxu0 0.0
    %312 = vmatpush1.xpose.msra.mxu0 0.0
    %313 = vmatprep.subr.mxu0 0.0
    %314 = vmatpush1.xpose.msra.mxu0 0.0
    %315 = vmatprep.subr.mxu0 0.0
    %316 = vmatpush1.xpose.msra.mxu0 0.0
    %317 = vmatprep.subr.mxu0 0.0
    %318 = vmatpush1.xpose.msra.mxu0 0.0
    %319 = vmatprep.subr.mxu0 0.0
    %320 = vmatpush1.xpose.msra.mxu0 0.0
    %321 = vmatprep.subr.mxu0 0.0
    %322 = vmatpush1.xpose.msra.mxu0 0.0
    %323 = vmatprep.subr.mxu0 0.0
    %324 = vmatpush1.xpose.msra.mxu0 0.0
    %325 = vmatprep.subr.mxu0 0.0
    %326 = vmatpush1.xpose.msra.mxu0 0.0
    %327 = vmatprep.subr.mxu0 0.0
    %328 = vmatpush1.xpose.msra.mxu0 0.0
    %329 = vmatprep.subr.mxu0 0.0
    %330 = vmatpush1.xpose.msra.mxu0 0.0
    %331 = vmatprep.subr.mxu0 0.0
    %332 = vmatpush1.xpose.msra.mxu0 0.0
    %333 = vmatprep.subr.mxu0 0.0
    %334 = vmatpush1.xpose.msra.mxu0 0.0
    %335 = vmatprep.subr.mxu0 0.0
    %336 = vmatpush1.xpose.msra.mxu0 0.0
    %337 = vmatprep.subr.mxu0 0.0
    %338 = vmatpush1.xpose.msra.mxu0 0.0
    %339 = vmatprep.subr.mxu0 0.0
    %340 = vmatpush1.xpose.msra.mxu0 0.0
    %341 = vmatprep.subr.mxu0 0.0
    %342 = vmatpush1.xpose.msra.mxu0 0.0
    %343 = vmatprep.subr.mxu0 0.0
    %344 = vmatpush1.xpose.msra.mxu0 0.0
    %345 = vmatprep.subr.mxu0 0.0
    %346 = vmatpush1.xpose.msra.mxu0 0.0
    %347 = vmatprep.subr.mxu0 0.0
    %348 = vmatpush1.xpose.msra.mxu0 0.0
    %349 = vmatprep.subr.mxu0 0.0
    %350 = vmatpush1.xpose.msra.mxu0 0.0
    %351 = vmatprep.subr.mxu0 0.0
    %352 = vmatpush1.xpose.msra.mxu0 0.0
    %353 = vmatprep.subr.mxu0 0.0
    %354 = vmatpush1.xpose.msra.mxu0 0.0
    %355 = vmatprep.subr.mxu0 0.0
    %356 = vmatpush1.xpose.msra.mxu0 0.0
    %357 = vmatprep.mubr.f32.mxu0 0.0
    %358 = vmatmul.mubr.f32.gmra.mrb[0].mxu0 %v289
    %v359 = vpop.f32.mrb[0].mxu0
    %v360 = vadd.f32 %v207, %v359
    %v361 = vpop.f32.mrb[0].mxu0
    %362 = vdwg.mxu0
    %v363 = vsel %vm211, %v283, -inf
    %364 = vmax.xlane.f32.xlu0 %v363
    %v365 = vpop.xlane.xlu0 %364
    %v366 = vsel %vm211, %v360, -inf
    %367 = vmax.xlane.f32.xlu0 %v366
    %v368 = vpop.xlane.xlu0 %367
    %v369 = vsub.f32 %v283, %v365
    %v370 = vsub.f32 %v360, %v368
    %v371 = vmul.f32 %v369, 1.442695
    %v372 = vpow.pop %v371
    %v373 = vmul.f32 %v370, 1.442695
    %v374 = vpow.pop %v373
    %v375 = vsel %vm211, %v372, 0.0
    %376 = vadd.xlane.f32.xlu0 %v375
    %v377 = vpop.xlane.xlu0 %376
    %v378 = vsel %vm211, %v374, 0.0
    %379 = vadd.xlane.f32.xlu0 %v378
    %v380 = vpop.xlane.xlu0 %379
    %v381 = vrcp.pop %v377
    %v382 = vrcp.pop %v380
    %v383 = vmul.f32 %v377, %v381
    %v384 = vmul.f32 %v380, %v382
    %v385 = vsub.f32 2.0, %v383
    %v386 = vsub.f32 2.0, %v384
    %v387 = vmul.f32 %v381, %v385
    %v388 = vmul.f32 %v382, %v386
    %v389 = vmul.f32 %v372, %v387
    %v390 = vmul.f32 %v374, %v388
    %391 = vrot.lane.b32.xlu0 %v194, 64
    %v392 = vpop.permute.xlu0 %391
    %v395 = vsel %vm211, %v389, 0
    %397 = vmatprep.subr.mxu0 0.0
    %398 = vmatpush1.msra.mxu0 %v392
    %399 = vmatprep.subr.mxu0 0.0
    %400 = vmatpush1.msra.mxu0 0.0
    %401 = vmatprep.subr.mxu0 0.0
    %402 = vmatpush1.msra.mxu0 0.0
    %403 = vmatprep.subr.mxu0 0.0
    %404 = vmatpush1.msra.mxu0 0.0
    %405 = vmatprep.subr.mxu0 0.0
    %406 = vmatpush1.msra.mxu0 0.0
    %407 = vmatprep.subr.mxu0 0.0
    %408 = vmatpush1.msra.mxu0 0.0
    %409 = vmatprep.subr.mxu0 0.0
    %410 = vmatpush1.msra.mxu0 0.0
    %411 = vmatprep.subr.mxu0 0.0
    %412 = vmatpush1.msra.mxu0 0.0
    %413 = vmatprep.subr.mxu0 0.0
    %414 = vmatpush1.msra.mxu0 0.0
    %415 = vmatprep.subr.mxu0 0.0
    %416 = vmatpush1.msra.mxu0 0.0
    %417 = vmatprep.subr.mxu0 0.0
    %418 = vmatpush1.msra.mxu0 0.0
    %419 = vmatprep.subr.mxu0 0.0
    %420 = vmatpush1.msra.mxu0 0.0
    %421 = vmatprep.subr.mxu0 0.0
    %422 = vmatpush1.msra.mxu0 0.0
    %423 = vmatprep.subr.mxu0 0.0
    %424 = vmatpush1.msra.mxu0 0.0
    %425 = vmatprep.subr.mxu0 0.0
    %426 = vmatpush1.msra.mxu0 0.0
    %427 = vmatprep.subr.mxu0 0.0
    %428 = vmatpush1.msra.mxu0 0.0
    %429 = vmatprep.subr.mxu0 0.0
    %430 = vmatpush1.msra.mxu0 0.0
    %431 = vmatprep.subr.mxu0 0.0
    %432 = vmatpush1.msra.mxu0 0.0
    %433 = vmatprep.subr.mxu0 0.0
    %434 = vmatpush1.msra.mxu0 0.0
    %435 = vmatprep.subr.mxu0 0.0
    %436 = vmatpush1.msra.mxu0 0.0
    %437 = vmatprep.subr.mxu0 0.0
    %438 = vmatpush1.msra.mxu0 0.0
    %439 = vmatprep.subr.mxu0 0.0
    %440 = vmatpush1.msra.mxu0 0.0
    %441 = vmatprep.subr.mxu0 0.0
    %442 = vmatpush1.msra.mxu0 0.0
    %443 = vmatprep.subr.mxu0 0.0
    %444 = vmatpush1.msra.mxu0 0.0
    %445 = vmatprep.subr.mxu0 0.0
    %446 = vmatpush1.msra.mxu0 0.0
    %447 = vmatprep.subr.mxu0 0.0
    %448 = vmatpush1.msra.mxu0 0.0
    %449 = vmatprep.subr.mxu0 0.0
    %450 = vmatpush1.msra.mxu0 0.0
    %451 = vmatprep.subr.mxu0 0.0
    %452 = vmatpush1.msra.mxu0 0.0
    %453 = vmatprep.subr.mxu0 0.0
    %454 = vmatpush1.msra.mxu0 0.0
    %455 = vmatprep.subr.mxu0 0.0
    %456 = vmatpush1.msra.mxu0 0.0
    %457 = vmatprep.subr.mxu0 0.0
    %458 = vmatpush1.msra.mxu0 0.0
    %459 = vmatprep.subr.mxu0 0.0
    %460 = vmatpush1.msra.mxu0 0.0
    %461 = vmatprep.mubr.f32.mxu0 0.0
    %462 = vmatmul.mubr.f32.gmra.mrb[0].mxu0 %v395
    %v463 = vpop.f32.mrb[0].mxu0
    %v464 = vadd.f32 0.0, %v463
    %v465 = vpop.f32.mrb[0].mxu0
    %466 = vdwg.mxu0
    %467 = vrot.lane.b32.xlu0 %v199, 64
    %v468 = vpop.permute.xlu0 %467
    %v471 = vsel %vm211, %v390, 0
    %473 = vmatprep.subr.mxu0 0.0
    %474 = vmatpush1.msra.mxu0 %v468
    %475 = vmatprep.subr.mxu0 0.0
    %476 = vmatpush1.msra.mxu0 0.0
    %477 = vmatprep.subr.mxu0 0.0
    %478 = vmatpush1.msra.mxu0 0.0
    %479 = vmatprep.subr.mxu0 0.0
    %480 = vmatpush1.msra.mxu0 0.0
    %481 = vmatprep.subr.mxu0 0.0
    %482 = vmatpush1.msra.mxu0 0.0
    %483 = vmatprep.subr.mxu0 0.0
    %484 = vmatpush1.msra.mxu0 0.0
    %485 = vmatprep.subr.mxu0 0.0
    %486 = vmatpush1.msra.mxu0 0.0
    %487 = vmatprep.subr.mxu0 0.0
    %488 = vmatpush1.msra.mxu0 0.0
    %489 = vmatprep.subr.mxu0 0.0
    %490 = vmatpush1.msra.mxu0 0.0
    %491 = vmatprep.subr.mxu0 0.0
    %492 = vmatpush1.msra.mxu0 0.0
    %493 = vmatprep.subr.mxu0 0.0
    %494 = vmatpush1.msra.mxu0 0.0
    %495 = vmatprep.subr.mxu0 0.0
    %496 = vmatpush1.msra.mxu0 0.0
    %497 = vmatprep.subr.mxu0 0.0
    %498 = vmatpush1.msra.mxu0 0.0
    %499 = vmatprep.subr.mxu0 0.0
    %500 = vmatpush1.msra.mxu0 0.0
    %501 = vmatprep.subr.mxu0 0.0
    %502 = vmatpush1.msra.mxu0 0.0
    %503 = vmatprep.subr.mxu0 0.0
    %504 = vmatpush1.msra.mxu0 0.0
    %505 = vmatprep.subr.mxu0 0.0
    %506 = vmatpush1.msra.mxu0 0.0
    %507 = vmatprep.subr.mxu0 0.0
    %508 = vmatpush1.msra.mxu0 0.0
    %509 = vmatprep.subr.mxu0 0.0
    %510 = vmatpush1.msra.mxu0 0.0
    %511 = vmatprep.subr.mxu0 0.0
    %512 = vmatpush1.msra.mxu0 0.0
    %513 = vmatprep.subr.mxu0 0.0
    %514 = vmatpush1.msra.mxu0 0.0
    %515 = vmatprep.subr.mxu0 0.0
    %516 = vmatpush1.msra.mxu0 0.0
    %517 = vmatprep.subr.mxu0 0.0
    %518 = vmatpush1.msra.mxu0 0.0
    %519 = vmatprep.subr.mxu0 0.0
    %520 = vmatpush1.msra.mxu0 0.0
    %521 = vmatprep.subr.mxu0 0.0
    %522 = vmatpush1.msra.mxu0 0.0
    %523 = vmatprep.subr.mxu0 0.0
    %524 = vmatpush1.msra.mxu0 0.0
    %525 = vmatprep.subr.mxu0 0.0
    %526 = vmatpush1.msra.mxu0 0.0
    %527 = vmatprep.subr.mxu0 0.0
    %528 = vmatpush1.msra.mxu0 0.0
    %529 = vmatprep.subr.mxu0 0.0
    %530 = vmatpush1.msra.mxu0 0.0
    %531 = vmatprep.subr.mxu0 0.0
    %532 = vmatpush1.msra.mxu0 0.0
    %533 = vmatprep.subr.mxu0 0.0
    %534 = vmatpush1.msra.mxu0 0.0
    %535 = vmatprep.subr.mxu0 0.0
    %536 = vmatpush1.msra.mxu0 0.0
    %537 = vmatprep.mubr.f32.mxu0 0.0
    %538 = vmatmul.mubr.f32.gmra.mrb[0].mxu0 %v471
    %v539 = vpop.f32.mrb[0].mxu0
    %v540 = vadd.f32 0.0, %v539
    %v541 = vpop.f32.mrb[0].mxu0
    %542 = vdwg.mxu0
    %v543 = vld [vmem:[#allocation5 + $0x20] sm:$0xff]
    %544 = vrot.lane.b32.xlu0 %v194, 120
    %v545 = vpop.permute.xlu0 %544
    %546 = vrot.lane.b32.xlu0 %v194, 88
    %v547 = vpop.permute.xlu0 %546
    %v548 = vsel %vm211, %v545, 0
    %v550 = vsel %vm211, %v547, 0
    %552 = vmatprep.subr.mxu0 0.0
    %553 = vmatpush1.xpose.msra.mxu0 %v550
    %554 = vmatprep.subr.mxu0 0.0
    %555 = vmatpush1.xpose.msra.mxu0 0.0
    %556 = vmatprep.subr.mxu0 0.0
    %557 = vmatpush1.xpose.msra.mxu0 0.0
    %558 = vmatprep.subr.mxu0 0.0
    %559 = vmatpush1.xpose.msra.mxu0 0.0
    %560 = vmatprep.subr.mxu0 0.0
    %561 = vmatpush1.xpose.msra.mxu0 0.0
    %562 = vmatprep.subr.mxu0 0.0
    %563 = vmatpush1.xpose.msra.mxu0 0.0
    %564 = vmatprep.subr.mxu0 0.0
    %565 = vmatpush1.xpose.msra.mxu0 0.0
    %566 = vmatprep.subr.mxu0 0.0
    %567 = vmatpush1.xpose.msra.mxu0 0.0
    %568 = vmatprep.subr.mxu0 0.0
    %569 = vmatpush1.xpose.msra.mxu0 0.0
    %570 = vmatprep.subr.mxu0 0.0
    %571 = vmatpush1.xpose.msra.mxu0 0.0
    %572 = vmatprep.subr.mxu0 0.0
    %573 = vmatpush1.xpose.msra.mxu0 0.0
    %574 = vmatprep.subr.mxu0 0.0
    %575 = vmatpush1.xpose.msra.mxu0 0.0
    %576 = vmatprep.subr.mxu0 0.0
    %577 = vmatpush1.xpose.msra.mxu0 0.0
    %578 = vmatprep.subr.mxu0 0.0
    %579 = vmatpush1.xpose.msra.mxu0 0.0
    %580 = vmatprep.subr.mxu0 0.0
    %581 = vmatpush1.xpose.msra.mxu0 0.0
    %582 = vmatprep.subr.mxu0 0.0
    %583 = vmatpush1.xpose.msra.mxu0 0.0
    %584 = vmatprep.subr.mxu0 0.0
    %585 = vmatpush1.xpose.msra.mxu0 0.0
    %586 = vmatprep.subr.mxu0 0.0
    %587 = vmatpush1.xpose.msra.mxu0 0.0
    %588 = vmatprep.subr.mxu0 0.0
    %589 = vmatpush1.xpose.msra.mxu0 0.0
    %590 = vmatprep.subr.mxu0 0.0
    %591 = vmatpush1.xpose.msra.mxu0 0.0
    %592 = vmatprep.subr.mxu0 0.0
    %593 = vmatpush1.xpose.msra.mxu0 0.0
    %594 = vmatprep.subr.mxu0 0.0
    %595 = vmatpush1.xpose.msra.mxu0 0.0
    %596 = vmatprep.subr.mxu0 0.0
    %597 = vmatpush1.xpose.msra.mxu0 0.0
    %598 = vmatprep.subr.mxu0 0.0
    %599 = vmatpush1.xpose.msra.mxu0 0.0
    %600 = vmatprep.subr.mxu0 0.0
    %601 = vmatpush1.xpose.msra.mxu0 0.0
    %602 = vmatprep.subr.mxu0 0.0
    %603 = vmatpush1.xpose.msra.mxu0 0.0
    %604 = vmatprep.subr.mxu0 0.0
    %605 = vmatpush1.xpose.msra.mxu0 0.0
    %606 = vmatprep.subr.mxu0 0.0
    %607 = vmatpush1.xpose.msra.mxu0 0.0
    %608 = vmatprep.subr.mxu0 0.0
    %609 = vmatpush1.xpose.msra.mxu0 0.0
    %610 = vmatprep.subr.mxu0 0.0
    %611 = vmatpush1.xpose.msra.mxu0 0.0
    %612 = vmatprep.subr.mxu0 0.0
    %613 = vmatpush1.xpose.msra.mxu0 0.0
    %614 = vmatprep.subr.mxu0 0.0
    %615 = vmatpush1.xpose.msra.mxu0 0.0
    %616 = vmatprep.mubr.f32.mxu0 0.0
    %617 = vmatmul.mubr.f32.gmra.mrb[0].mxu0 %v548
    %v618 = vpop.f32.mrb[0].mxu0
    %v619 = vadd.f32 %v207, %v618
    %v620 = vpop.f32.mrb[0].mxu0
    %621 = vdwg.mxu0
    %622 = vrot.lane.b32.xlu0 %v199, 120
    %v623 = vpop.permute.xlu0 %622
    %624 = vrot.lane.b32.xlu0 %v199, 88
    %v625 = vpop.permute.xlu0 %624
    %v626 = vsel %vm211, %v623, 0
    %v628 = vsel %vm211, %v625, 0
    %630 = vmatprep.subr.mxu0 0.0
    %631 = vmatpush1.xpose.msra.mxu0 %v628
    %632 = vmatprep.subr.mxu0 0.0
    %633 = vmatpush1.xpose.msra.mxu0 0.0
    %634 = vmatprep.subr.mxu0 0.0
    %635 = vmatpush1.xpose.msra.mxu0 0.0
    %636 = vmatprep.subr.mxu0 0.0
    %637 = vmatpush1.xpose.msra.mxu0 0.0
    %638 = vmatprep.subr.mxu0 0.0
    %639 = vmatpush1.xpose.msra.mxu0 0.0
    %640 = vmatprep.subr.mxu0 0.0
    %641 = vmatpush1.xpose.msra.mxu0 0.0
    %642 = vmatprep.subr.mxu0 0.0
    %643 = vmatpush1.xpose.msra.mxu0 0.0
    %644 = vmatprep.subr.mxu0 0.0
    %645 = vmatpush1.xpose.msra.mxu0 0.0
    %646 = vmatprep.subr.mxu0 0.0
    %647 = vmatpush1.xpose.msra.mxu0 0.0
    %648 = vmatprep.subr.mxu0 0.0
    %649 = vmatpush1.xpose.msra.mxu0 0.0
    %650 = vmatprep.subr.mxu0 0.0
    %651 = vmatpush1.xpose.msra.mxu0 0.0
    %652 = vmatprep.subr.mxu0 0.0
    %653 = vmatpush1.xpose.msra.mxu0 0.0
    %654 = vmatprep.subr.mxu0 0.0
    %655 = vmatpush1.xpose.msra.mxu0 0.0
    %656 = vmatprep.subr.mxu0 0.0
    %657 = vmatpush1.xpose.msra.mxu0 0.0
    %658 = vmatprep.subr.mxu0 0.0
    %659 = vmatpush1.xpose.msra.mxu0 0.0
    %660 = vmatprep.subr.mxu0 0.0
    %661 = vmatpush1.xpose.msra.mxu0 0.0
    %662 = vmatprep.subr.mxu0 0.0
    %663 = vmatpush1.xpose.msra.mxu0 0.0
    %664 = vmatprep.subr.mxu0 0.0
    %665 = vmatpush1.xpose.msra.mxu0 0.0
    %666 = vmatprep.subr.mxu0 0.0
    %667 = vmatpush1.xpose.msra.mxu0 0.0
    %668 = vmatprep.subr.mxu0 0.0
    %669 = vmatpush1.xpose.msra.mxu0 0.0
    %670 = vmatprep.subr.mxu0 0.0
    %671 = vmatpush1.xpose.msra.mxu0 0.0
    %672 = vmatprep.subr.mxu0 0.0
    %673 = vmatpush1.xpose.msra.mxu0 0.0
    %674 = vmatprep.subr.mxu0 0.0
    %675 = vmatpush1.xpose.msra.mxu0 0.0
    %676 = vmatprep.subr.mxu0 0.0
    %677 = vmatpush1.xpose.msra.mxu0 0.0
    %678 = vmatprep.subr.mxu0 0.0
    %679 = vmatpush1.xpose.msra.mxu0 0.0
    %680 = vmatprep.subr.mxu0 0.0
    %681 = vmatpush1.xpose.msra.mxu0 0.0
    %682 = vmatprep.subr.mxu0 0.0
    %683 = vmatpush1.xpose.msra.mxu0 0.0
    %684 = vmatprep.subr.mxu0 0.0
    %685 = vmatpush1.xpose.msra.mxu0 0.0
    %686 = vmatprep.subr.mxu0 0.0
    %687 = vmatpush1.xpose.msra.mxu0 0.0
    %688 = vmatprep.subr.mxu0 0.0
    %689 = vmatpush1.xpose.msra.mxu0 0.0
    %690 = vmatprep.subr.mxu0 0.0
    %691 = vmatpush1.xpose.msra.mxu0 0.0
    %692 = vmatprep.subr.mxu0 0.0
    %693 = vmatpush1.xpose.msra.mxu0 0.0
    %694 = vmatprep.mubr.f32.mxu0 0.0
    %695 = vmatmul.mubr.f32.gmra.mrb[0].mxu0 %v626
    %v696 = vpop.f32.mrb[0].mxu0
    %v697 = vadd.f32 %v207, %v696
    %v698 = vpop.f32.mrb[0].mxu0
    %699 = vdwg.mxu0
    %v700 = vsel %vm211, %v619, -inf
    %701 = vmax.xlane.f32.xlu0 %v700
    %v702 = vpop.xlane.xlu0 %701
    %v703 = vsel %vm211, %v697, -inf
    %704 = vmax.xlane.f32.xlu0 %v703
    %v705 = vpop.xlane.xlu0 %704
    %v706 = vsub.f32 %v619, %v702
    %v707 = vsub.f32 %v697, %v705
    %v708 = vmul.f32 %v706, 1.442695
    %v709 = vpow.pop %v708
    %v710 = vmul.f32 %v707, 1.442695
    %v711 = vpow.pop %v710
    %v712 = vsel %vm211, %v709, 0.0
    %713 = vadd.xlane.f32.xlu0 %v712
    %v714 = vpop.xlane.xlu0 %713
    %v715 = vsel %vm211, %v711, 0.0
    %716 = vadd.xlane.f32.xlu0 %v715
    %v717 = vpop.xlane.xlu0 %716
    %v718 = vrcp.pop %v714
    %v719 = vrcp.pop %v717
    %v720 = vmul.f32 %v714, %v718
    %v721 = vmul.f32 %v717, %v719
    %v722 = vsub.f32 2.0, %v720
    %v723 = vsub.f32 2.0, %v721
    %v724 = vmul.f32 %v718, %v722
    %v725 = vmul.f32 %v719, %v723
    %v726 = vmul.f32 %v709, %v724
    %v727 = vmul.f32 %v711, %v725
    %728 = vrot.lane.b32.xlu0 %v194, 56
    %v729 = vpop.permute.xlu0 %728
    %v732 = vsel %vm211, %v726, 0
    %734 = vmatprep.subr.mxu0 0.0
    %735 = vmatpush1.msra.mxu0 %v729
    %736 = vmatprep.subr.mxu0 0.0
    %737 = vmatpush1.msra.mxu0 0.0
    %738 = vmatprep.subr.mxu0 0.0
    %739 = vmatpush1.msra.mxu0 0.0
    %740 = vmatprep.subr.mxu0 0.0
    %741 = vmatpush1.msra.mxu0 0.0
    %742 = vmatprep.subr.mxu0 0.0
    %743 = vmatpush1.msra.mxu0 0.0
    %744 = vmatprep.subr.mxu0 0.0
    %745 = vmatpush1.msra.mxu0 0.0
    %746 = vmatprep.subr.mxu0 0.0
    %747 = vmatpush1.msra.mxu0 0.0
    %748 = vmatprep.subr.mxu0 0.0
    %749 = vmatpush1.msra.mxu0 0.0
    %750 = vmatprep.subr.mxu0 0.0
    %751 = vmatpush1.msra.mxu0 0.0
    %752 = vmatprep.subr.mxu0 0.0
    %753 = vmatpush1.msra.mxu0 0.0
    %754 = vmatprep.subr.mxu0 0.0
    %755 = vmatpush1.msra.mxu0 0.0
    %756 = vmatprep.subr.mxu0 0.0
    %757 = vmatpush1.msra.mxu0 0.0
    %758 = vmatprep.subr.mxu0 0.0
    %759 = vmatpush1.msra.mxu0 0.0
    %760 = vmatprep.subr.mxu0 0.0
    %761 = vmatpush1.msra.mxu0 0.0
    %762 = vmatprep.subr.mxu0 0.0
    %763 = vmatpush1.msra.mxu0 0.0
    %764 = vmatprep.subr.mxu0 0.0
    %765 = vmatpush1.msra.mxu0 0.0
    %766 = vmatprep.subr.mxu0 0.0
    %767 = vmatpush1.msra.mxu0 0.0
    %768 = vmatprep.subr.mxu0 0.0
    %769 = vmatpush1.msra.mxu0 0.0
    %770 = vmatprep.subr.mxu0 0.0
    %771 = vmatpush1.msra.mxu0 0.0
    %772 = vmatprep.subr.mxu0 0.0
    %773 = vmatpush1.msra.mxu0 0.0
    %774 = vmatprep.subr.mxu0 0.0
    %775 = vmatpush1.msra.mxu0 0.0
    %776 = vmatprep.subr.mxu0 0.0
    %777 = vmatpush1.msra.mxu0 0.0
    %778 = vmatprep.subr.mxu0 0.0
    %779 = vmatpush1.msra.mxu0 0.0
    %780 = vmatprep.subr.mxu0 0.0
    %781 = vmatpush1.msra.mxu0 0.0
    %782 = vmatprep.subr.mxu0 0.0
    %783 = vmatpush1.msra.mxu0 0.0
    %784 = vmatprep.subr.mxu0 0.0
    %785 = vmatpush1.msra.mxu0 0.0
    %786 = vmatprep.subr.mxu0 0.0
    %787 = vmatpush1.msra.mxu0 0.0
    %788 = vmatprep.subr.mxu0 0.0
    %789 = vmatpush1.msra.mxu0 0.0
    %790 = vmatprep.subr.mxu0 0.0
    %791 = vmatpush1.msra.mxu0 0.0
    %792 = vmatprep.subr.mxu0 0.0
    %793 = vmatpush1.msra.mxu0 0.0
    %794 = vmatprep.subr.mxu0 0.0
    %795 = vmatpush1.msra.mxu0 0.0
    %796 = vmatprep.subr.mxu0 0.0
    %797 = vmatpush1.msra.mxu0 0.0
    %798 = vmatprep.mubr.f32.mxu0 0.0
    %799 = vmatmul.mubr.f32.gmra.mrb[0].mxu0 %v732
    %v800 = vpop.f32.mrb[0].mxu0
    %v801 = vadd.f32 0.0, %v800
    %v802 = vpop.f32.mrb[0].mxu0
    %803 = vdwg.mxu0
    %804 = vrot.lane.b32.xlu0 %v199, 56
    %v805 = vpop.permute.xlu0 %804
    %v808 = vsel %vm211, %v727, 0
    %810 = vmatprep.subr.mxu0 0.0
    %811 = vmatpush1.msra.mxu0 %v805
    %812 = vmatprep.subr.mxu0 0.0
    %813 = vmatpush1.msra.mxu0 0.0
    %814 = vmatprep.subr.mxu0 0.0
    %815 = vmatpush1.msra.mxu0 0.0
    %816 = vmatprep.subr.mxu0 0.0
    %817 = vmatpush1.msra.mxu0 0.0
    %818 = vmatprep.subr.mxu0 0.0
    %819 = vmatpush1.msra.mxu0 0.0
    %820 = vmatprep.subr.mxu0 0.0
    %821 = vmatpush1.msra.mxu0 0.0
    %822 = vmatprep.subr.mxu0 0.0
    %823 = vmatpush1.msra.mxu0 0.0
    %824 = vmatprep.subr.mxu0 0.0
    %825 = vmatpush1.msra.mxu0 0.0
    %826 = vmatprep.subr.mxu0 0.0
    %827 = vmatpush1.msra.mxu0 0.0
    %828 = vmatprep.subr.mxu0 0.0
    %829 = vmatpush1.msra.mxu0 0.0
    %830 = vmatprep.subr.mxu0 0.0
    %831 = vmatpush1.msra.mxu0 0.0
    %832 = vmatprep.subr.mxu0 0.0
    %833 = vmatpush1.msra.mxu0 0.0
    %834 = vmatprep.subr.mxu0 0.0
    %835 = vmatpush1.msra.mxu0 0.0
    %836 = vmatprep.subr.mxu0 0.0
    %837 = vmatpush1.msra.mxu0 0.0
    %838 = vmatprep.subr.mxu0 0.0
    %839 = vmatpush1.msra.mxu0 0.0
    %840 = vmatprep.subr.mxu0 0.0
    %841 = vmatpush1.msra.mxu0 0.0
    %842 = vmatprep.subr.mxu0 0.0
    %843 = vmatpush1.msra.mxu0 0.0
    %844 = vmatprep.subr.mxu0 0.0
    %845 = vmatpush1.msra.mxu0 0.0
    %846 = vmatprep.subr.mxu0 0.0
    %847 = vmatpush1.msra.mxu0 0.0
    %848 = vmatprep.subr.mxu0 0.0
    %849 = vmatpush1.msra.mxu0 0.0
    %850 = vmatprep.subr.mxu0 0.0
    %851 = vmatpush1.msra.mxu0 0.0
    %852 = vmatprep.subr.mxu0 0.0
    %853 = vmatpush1.msra.mxu0 0.0
    %854 = vmatprep.subr.mxu0 0.0
    %855 = vmatpush1.msra.mxu0 0.0
    %856 = vmatprep.subr.mxu0 0.0
    %857 = vmatpush1.msra.mxu0 0.0
    %858 = vmatprep.subr.mxu0 0.0
    %859 = vmatpush1.msra.mxu0 0.0
    %860 = vmatprep.subr.mxu0 0.0
    %861 = vmatpush1.msra.mxu0 0.0
    %862 = vmatprep.subr.mxu0 0.0
    %863 = vmatpush1.msra.mxu0 0.0
    %864 = vmatprep.subr.mxu0 0.0
    %865 = vmatpush1.msra.mxu0 0.0
    %866 = vmatprep.subr.mxu0 0.0
    %867 = vmatpush1.msra.mxu0 0.0
    %868 = vmatprep.subr.mxu0 0.0
    %869 = vmatpush1.msra.mxu0 0.0
    %870 = vmatprep.subr.mxu0 0.0
    %871 = vmatpush1.msra.mxu0 0.0
    %872 = vmatprep.subr.mxu0 0.0
    %873 = vmatpush1.msra.mxu0 0.0
    %874 = vmatprep.mubr.f32.mxu0 0.0
    %875 = vmatmul.mubr.f32.gmra.mrb[0].mxu0 %v808
    %v876 = vpop.f32.mrb[0].mxu0
    %v877 = vadd.f32 0.0, %v876
    %v878 = vpop.f32.mrb[0].mxu0
    %879 = vdwg.mxu0
    %v880 = vld [vmem:[#allocation5 + $0x28] sm:$0xff]
    %v882 = vsel %vm211, %v801, 0
    %v885 = vsel %vm211, %v877, 0
    %887 = vmatprep.subr.mxu0 0.0
    %888 = vmatpush1.msra.mxu0 %v880
    %889 = vmatprep.subr.mxu0 0.0
    %890 = vmatpush1.msra.mxu0 0.0
    %891 = vmatprep.subr.mxu0 0.0
    %892 = vmatpush1.msra.mxu0 0.0
    %893 = vmatprep.subr.mxu0 0.0
    %894 = vmatpush1.msra.mxu0 0.0
    %895 = vmatprep.subr.mxu0 0.0
    %896 = vmatpush1.msra.mxu0 0.0
    %897 = vmatprep.subr.mxu0 0.0
    %898 = vmatpush1.msra.mxu0 0.0
    %899 = vmatprep.subr.mxu0 0.0
    %900 = vmatpush1.msra.mxu0 0.0
    %901 = vmatprep.subr.mxu0 0.0
    %902 = vmatpush1.msra.mxu0 0.0
    %903 = vmatprep.subr.mxu0 0.0
    %904 = vmatpush1.msra.mxu0 0.0
    %905 = vmatprep.subr.mxu0 0.0
    %906 = vmatpush1.msra.mxu0 0.0
    %907 = vmatprep.subr.mxu0 0.0
    %908 = vmatpush1.msra.mxu0 0.0
    %909 = vmatprep.subr.mxu0 0.0
    %910 = vmatpush1.msra.mxu0 0.0
    %911 = vmatprep.subr.mxu0 0.0
    %912 = vmatpush1.msra.mxu0 0.0
    %913 = vmatprep.subr.mxu0 0.0
    %914 = vmatpush1.msra.mxu0 0.0
    %915 = vmatprep.subr.mxu0 0.0
    %916 = vmatpush1.msra.mxu0 0.0
    %917 = vmatprep.subr.mxu0 0.0
    %918 = vmatpush1.msra.mxu0 0.0
    %919 = vmatprep.subr.mxu0 0.0
    %920 = vmatpush1.msra.mxu0 0.0
    %921 = vmatprep.subr.mxu0 0.0
    %922 = vmatpush1.msra.mxu0 0.0
    %923 = vmatprep.subr.mxu0 0.0
    %924 = vmatpush1.msra.mxu0 0.0
    %925 = vmatprep.subr.mxu0 0.0
    %926 = vmatpush1.msra.mxu0 0.0
    %927 = vmatprep.subr.mxu0 0.0
    %928 = vmatpush1.msra.mxu0 0.0
    %929 = vmatprep.subr.mxu0 0.0
    %930 = vmatpush1.msra.mxu0 0.0
    %931 = vmatprep.subr.mxu0 0.0
    %932 = vmatpush1.msra.mxu0 0.0
    %933 = vmatprep.subr.mxu0 0.0
    %934 = vmatpush1.msra.mxu0 0.0
    %935 = vmatprep.subr.mxu0 0.0
    %936 = vmatpush1.msra.mxu0 0.0
    %937 = vmatprep.subr.mxu0 0.0
    %938 = vmatpush1.msra.mxu0 0.0
    %939 = vmatprep.subr.mxu0 0.0
    %940 = vmatpush1.msra.mxu0 0.0
    %941 = vmatprep.subr.mxu0 0.0
    %942 = vmatpush1.msra.mxu0 0.0
    %943 = vmatprep.subr.mxu0 0.0
    %944 = vmatpush1.msra.mxu0 0.0
    %945 = vmatprep.subr.mxu0 0.0
    %946 = vmatpush1.msra.mxu0 0.0
    %947 = vmatprep.subr.mxu0 0.0
    %948 = vmatpush1.msra.mxu0 0.0
    %949 = vmatprep.subr.mxu0 0.0
    %950 = vmatpush1.msra.mxu0 0.0
    %951 = vmatprep.mubr.f32.mxu0 0.0
    %952 = vmatmul.mubr.f32.gmra.mrb[0].mxu0 %v882
    %v953 = vpop.f32.mrb[0].mxu0
    %v954 = vadd.f32 0.0, %v953
    %v955 = vpop.f32.mrb[0].mxu0
    %956 = vmatprep.mubr.f32.mxu0 0.0
    %957 = vmatmul.mubr.f32.gmra.mrb[0].mxu0 %v885
    %v958 = vpop.f32.mrb[0].mxu0
    %v959 = vadd.f32 0.0, %v958
    %v960 = vpop.f32.mrb[0].mxu0
    %961 = vdwg.mxu0
    %v963 = vsel %vm211, %v464, 0
    %v966 = vsel %vm211, %v540, 0
    %968 = vmatprep.subr.mxu0 0.0
    %969 = vmatpush1.msra.mxu0 %v543
    %970 = vmatprep.subr.mxu0 0.0
    %971 = vmatpush1.msra.mxu0 0.0
    %972 = vmatprep.subr.mxu0 0.0
    %973 = vmatpush1.msra.mxu0 0.0
    %974 = vmatprep.subr.mxu0 0.0
    %975 = vmatpush1.msra.mxu0 0.0
    %976 = vmatprep.subr.mxu0 0.0
    %977 = vmatpush1.msra.mxu0 0.0
    %978 = vmatprep.subr.mxu0 0.0
    %979 = vmatpush1.msra.mxu0 0.0
    %980 = vmatprep.subr.mxu0 0.0
    %981 = vmatpush1.msra.mxu0 0.0
    %982 = vmatprep.subr.mxu0 0.0
    %983 = vmatpush1.msra.mxu0 0.0
    %984 = vmatprep.subr.mxu0 0.0
    %985 = vmatpush1.msra.mxu0 0.0
    %986 = vmatprep.subr.mxu0 0.0
    %987 = vmatpush1.msra.mxu0 0.0
    %988 = vmatprep.subr.mxu0 0.0
    %989 = vmatpush1.msra.mxu0 0.0
    %990 = vmatprep.subr.mxu0 0.0
    %991 = vmatpush1.msra.mxu0 0.0
    %992 = vmatprep.subr.mxu0 0.0
    %993 = vmatpush1.msra.mxu0 0.0
    %994 = vmatprep.subr.mxu0 0.0
    %995 = vmatpush1.msra.mxu0 0.0
    %996 = vmatprep.subr.mxu0 0.0
    %997 = vmatpush1.msra.mxu0 0.0
    %998 = vmatprep.subr.mxu0 0.0
    %999 = vmatpush1.msra.mxu0 0.0
    %1000 = vmatprep.subr.mxu0 0.0
    %1001 = vmatpush1.msra.mxu0 0.0
    %1002 = vmatprep.subr.mxu0 0.0
    %1003 = vmatpush1.msra.mxu0 0.0
    %1004 = vmatprep.subr.mxu0 0.0
    %1005 = vmatpush1.msra.mxu0 0.0
    %1006 = vmatprep.subr.mxu0 0.0
    %1007 = vmatpush1.msra.mxu0 0.0
    %1008 = vmatprep.subr.mxu0 0.0
    %1009 = vmatpush1.msra.mxu0 0.0
    %1010 = vmatprep.subr.mxu0 0.0
    %1011 = vmatpush1.msra.mxu0 0.0
    %1012 = vmatprep.subr.mxu0 0.0
    %1013 = vmatpush1.msra.mxu0 0.0
    %1014 = vmatprep.subr.mxu0 0.0
    %1015 = vmatpush1.msra.mxu0 0.0
    %1016 = vmatprep.subr.mxu0 0.0
    %1017 = vmatpush1.msra.mxu0 0.0
    %1018 = vmatprep.subr.mxu0 0.0
    %1019 = vmatpush1.msra.mxu0 0.0
    %1020 = vmatprep.subr.mxu0 0.0
    %1021 = vmatpush1.msra.mxu0 0.0
    %1022 = vmatprep.subr.mxu0 0.0
    %1023 = vmatpush1.msra.mxu0 0.0
    %1024 = vmatprep.subr.mxu0 0.0
    %1025 = vmatpush1.msra.mxu0 0.0
    %1026 = vmatprep.subr.mxu0 0.0
    %1027 = vmatpush1.msra.mxu0 0.0
    %1028 = vmatprep.subr.mxu0 0.0
    %1029 = vmatpush1.msra.mxu0 0.0
    %1030 = vmatprep.subr.mxu0 0.0
    %1031 = vmatpush1.msra.mxu0 0.0
    %1032 = vmatprep.mubr.f32.mxu0 0.0
    %1033 = vmatmul.mubr.f32.gmra.mrb[0].mxu0 %v963
    %v1034 = vpop.f32.mrb[0].mxu0
    %v1035 = vadd.f32 %v954, %v1034
    %v1036 = vpop.f32.mrb[0].mxu0
    %1037 = vmatprep.mubr.f32.mxu0 0.0
    %1038 = vmatmul.mubr.f32.gmra.mrb[0].mxu0 %v966
    %v1039 = vpop.f32.mrb[0].mxu0
    %v1040 = vadd.f32 %v959, %v1039
    %v1041 = vpop.f32.mrb[0].mxu0
    %1042 = vdwg.mxu0
    %1043 = vrot.lane.b32.xlu0 %v194, 112
    %v1044 = vpop.permute.xlu0 %1043
    %1045 = vrot.lane.b32.xlu0 %v194, 80
    %v1046 = vpop.permute.xlu0 %1045
    %v1047 = vsel %vm211, %v1044, 0
    %v1049 = vsel %vm211, %v1046, 0
    %1051 = vmatprep.subr.mxu0 0.0
    %1052 = vmatpush1.xpose.msra.mxu0 %v1049
    %1053 = vmatprep.subr.mxu0 0.0
    %1054 = vmatpush1.xpose.msra.mxu0 0.0
    %1055 = vmatprep.subr.mxu0 0.0
    %1056 = vmatpush1.xpose.msra.mxu0 0.0
    %1057 = vmatprep.subr.mxu0 0.0
    %1058 = vmatpush1.xpose.msra.mxu0 0.0
    %1059 = vmatprep.subr.mxu0 0.0
    %1060 = vmatpush1.xpose.msra.mxu0 0.0
    %1061 = vmatprep.subr.mxu0 0.0
    %1062 = vmatpush1.xpose.msra.mxu0 0.0
    %1063 = vmatprep.subr.mxu0 0.0
    %1064 = vmatpush1.xpose.msra.mxu0 0.0
    %1065 = vmatprep.subr.mxu0 0.0
    %1066 = vmatpush1.xpose.msra.mxu0 0.0
    %1067 = vmatprep.subr.mxu0 0.0
    %1068 = vmatpush1.xpose.msra.mxu0 0.0
    %1069 = vmatprep.subr.mxu0 0.0
    %1070 = vmatpush1.xpose.msra.mxu0 0.0
    %1071 = vmatprep.subr.mxu0 0.0
    %1072 = vmatpush1.xpose.msra.mxu0 0.0
    %1073 = vmatprep.subr.mxu0 0.0
    %1074 = vmatpush1.xpose.msra.mxu0 0.0
    %1075 = vmatprep.subr.mxu0 0.0
    %1076 = vmatpush1.xpose.msra.mxu0 0.0
    %1077 = vmatprep.subr.mxu0 0.0
    %1078 = vmatpush1.xpose.msra.mxu0 0.0
    %1079 = vmatprep.subr.mxu0 0.0
    %1080 = vmatpush1.xpose.msra.mxu0 0.0
    %1081 = vmatprep.subr.mxu0 0.0
    %1082 = vmatpush1.xpose.msra.mxu0 0.0
    %1083 = vmatprep.subr.mxu0 0.0
    %1084 = vmatpush1.xpose.msra.mxu0 0.0
    %1085 = vmatprep.subr.mxu0 0.0
    %1086 = vmatpush1.xpose.msra.mxu0 0.0
    %1087 = vmatprep.subr.mxu0 0.0
    %1088 = vmatpush1.xpose.msra.mxu0 0.0
    %1089 = vmatprep.subr.mxu0 0.0
    %1090 = vmatpush1.xpose.msra.mxu0 0.0
    %1091 = vmatprep.subr.mxu0 0.0
    %1092 = vmatpush1.xpose.msra.mxu0 0.0
    %1093 = vmatprep.subr.mxu0 0.0
    %1094 = vmatpush1.xpose.msra.mxu0 0.0
    %1095 = vmatprep.subr.mxu0 0.0
    %1096 = vmatpush1.xpose.msra.mxu0 0.0
    %1097 = vmatprep.subr.mxu0 0.0
    %1098 = vmatpush1.xpose.msra.mxu0 0.0
    %1099 = vmatprep.subr.mxu0 0.0
    %1100 = vmatpush1.xpose.msra.mxu0 0.0
    %1101 = vmatprep.subr.mxu0 0.0
    %1102 = vmatpush1.xpose.msra.mxu0 0.0
    %1103 = vmatprep.subr.mxu0 0.0
    %1104 = vmatpush1.xpose.msra.mxu0 0.0
    %1105 = vmatprep.subr.mxu0 0.0
    %1106 = vmatpush1.xpose.msra.mxu0 0.0
    %1107 = vmatprep.subr.mxu0 0.0
    %1108 = vmatpush1.xpose.msra.mxu0 0.0
    %1109 = vmatprep.subr.mxu0 0.0
    %1110 = vmatpush1.xpose.msra.mxu0 0.0
    %1111 = vmatprep.subr.mxu0 0.0
    %1112 = vmatpush1.xpose.msra.mxu0 0.0
    %1113 = vmatprep.subr.mxu0 0.0
    %1114 = vmatpush1.xpose.msra.mxu0 0.0
    %1115 = vmatprep.mubr.f32.mxu0 0.0
    %1116 = vmatmul.mubr.f32.gmra.mrb[0].mxu0 %v1047
    %v1117 = vpop.f32.mrb[0].mxu0
    %v1118 = vadd.f32 %v207, %v1117
    %v1119 = vpop.f32.mrb[0].mxu0
    %1120 = vdwg.mxu0
    %1121 = vrot.lane.b32.xlu0 %v199, 112
    %v1122 = vpop.permute.xlu0 %1121
    %1123 = vrot.lane.b32.xlu0 %v199, 80
    %v1124 = vpop.permute.xlu0 %1123
    %v1125 = vsel %vm211, %v1122, 0
    %v1127 = vsel %vm211, %v1124, 0
    %1129 = vmatprep.subr.mxu0 0.0
    %1130 = vmatpush1.xpose.msra.mxu0 %v1127
    %1131 = vmatprep.subr.mxu0 0.0
    %1132 = vmatpush1.xpose.msra.mxu0 0.0
    %1133 = vmatprep.subr.mxu0 0.0
    %1134 = vmatpush1.xpose.msra.mxu0 0.0
    %1135 = vmatprep.subr.mxu0 0.0
    %1136 = vmatpush1.xpose.msra.mxu0 0.0
    %1137 = vmatprep.subr.mxu0 0.0
    %1138 = vmatpush1.xpose.msra.mxu0 0.0
    %1139 = vmatprep.subr.mxu0 0.0
    %1140 = vmatpush1.xpose.msra.mxu0 0.0
    %1141 = vmatprep.subr.mxu0 0.0
    %1142 = vmatpush1.xpose.msra.mxu0 0.0
    %1143 = vmatprep.subr.mxu0 0.0
    %1144 = vmatpush1.xpose.msra.mxu0 0.0
    %1145 = vmatprep.subr.mxu0 0.0
    %1146 = vmatpush1.xpose.msra.mxu0 0.0
    %1147 = vmatprep.subr.mxu0 0.0
    %1148 = vmatpush1.xpose.msra.mxu0 0.0
    %1149 = vmatprep.subr.mxu0 0.0
    %1150 = vmatpush1.xpose.msra.mxu0 0.0
    %1151 = vmatprep.subr.mxu0 0.0
    %1152 = vmatpush1.xpose.msra.mxu0 0.0
    %1153 = vmatprep.subr.mxu0 0.0
    %1154 = vmatpush1.xpose.msra.mxu0 0.0
    %1155 = vmatprep.subr.mxu0 0.0
    %1156 = vmatpush1.xpose.msra.mxu0 0.0
    %1157 = vmatprep.subr.mxu0 0.0
    %1158 = vmatpush1.xpose.msra.mxu0 0.0
    %1159 = vmatprep.subr.mxu0 0.0
    %1160 = vmatpush1.xpose.msra.mxu0 0.0
    %1161 = vmatprep.subr.mxu0 0.0
    %1162 = vmatpush1.xpose.msra.mxu0 0.0
    %1163 = vmatprep.subr.mxu0 0.0
    %1164 = vmatpush1.xpose.msra.mxu0 0.0
    %1165 = vmatprep.subr.mxu0 0.0
    %1166 = vmatpush1.xpose.msra.mxu0 0.0
    %1167 = vmatprep.subr.mxu0 0.0
    %1168 = vmatpush1.xpose.msra.mxu0 0.0
    %1169 = vmatprep.subr.mxu0 0.0
    %1170 = vmatpush1.xpose.msra.mxu0 0.0
    %1171 = vmatprep.subr.mxu0 0.0
    %1172 = vmatpush1.xpose.msra.mxu0 0.0
    %1173 = vmatprep.subr.mxu0 0.0
    %1174 = vmatpush1.xpose.msra.mxu0 0.0
    %1175 = vmatprep.subr.mxu0 0.0
    %1176 = vmatpush1.xpose.msra.mxu0 0.0
    %1177 = vmatprep.subr.mxu0 0.0
    %1178 = vmatpush1.xpose.msra.mxu0 0.0
    %1179 = vmatprep.subr.mxu0 0.0
    %1180 = vmatpush1.xpose.msra.mxu0 0.0
    %1181 = vmatprep.subr.mxu0 0.0
    %1182 = vmatpush1.xpose.msra.mxu0 0.0
    %1183 = vmatprep.subr.mxu0 0.0
    %1184 = vmatpush1.xpose.msra.mxu0 0.0
    %1185 = vmatprep.subr.mxu0 0.0
    %1186 = vmatpush1.xpose.msra.mxu0 0.0
    %1187 = vmatprep.subr.mxu0 0.0
    %1188 = vmatpush1.xpose.msra.mxu0 0.0
    %1189 = vmatprep.subr.mxu0 0.0
    %1190 = vmatpush1.xpose.msra.mxu0 0.0
    %1191 = vmatprep.subr.mxu0 0.0
    %1192 = vmatpush1.xpose.msra.mxu0 0.0
    %1193 = vmatprep.mubr.f32.mxu0 0.0
    %1194 = vmatmul.mubr.f32.gmra.mrb[0].mxu0 %v1125
    %v1195 = vpop.f32.mrb[0].mxu0
    %v1196 = vadd.f32 %v207, %v1195
    %v1197 = vpop.f32.mrb[0].mxu0
    %1198 = vdwg.mxu0
    %v1199 = vsel %vm211, %v1118, -inf
    %1200 = vmax.xlane.f32.xlu0 %v1199
    %v1201 = vpop.xlane.xlu0 %1200
    %v1202 = vsel %vm211, %v1196, -inf
    %1203 = vmax.xlane.f32.xlu0 %v1202
    %v1204 = vpop.xlane.xlu0 %1203
    %v1205 = vsub.f32 %v1118, %v1201
    %v1206 = vsub.f32 %v1196, %v1204
    %v1207 = vmul.f32 %v1205, 1.442695
    %v1208 = vpow.pop %v1207
    %v1209 = vmul.f32 %v1206, 1.442695
    %v1210 = vpow.pop %v1209
    %v1211 = vsel %vm211, %v1208, 0.0
    %1212 = vadd.xlane.f32.xlu0 %v1211
    %v1213 = vpop.xlane.xlu0 %1212
    %v1214 = vsel %vm211, %v1210, 0.0
    %1215 = vadd.xlane.f32.xlu0 %v1214
    %v1216 = vpop.xlane.xlu0 %1215
    %v1217 = vrcp.pop %v1213
    %v1218 = vrcp.pop %v1216
    %v1219 = vmul.f32 %v1213, %v1217
    %v1220 = vmul.f32 %v1216, %v1218
    %v1221 = vsub.f32 2.0, %v1219
    %v1222 = vsub.f32 2.0, %v1220
    %v1223 = vmul.f32 %v1217, %v1221
    %v1224 = vmul.f32 %v1218, %v1222
    %v1225 = vmul.f32 %v1208, %v1223
    %v1226 = vmul.f32 %v1210, %v1224
    %1227 = vrot.lane.b32.xlu0 %v194, 48
    %v1228 = vpop.permute.xlu0 %1227
    %v1231 = vsel %vm211, %v1225, 0
    %1233 = vmatprep.subr.mxu0 0.0
    %1234 = vmatpush1.msra.mxu0 %v1228
    %1235 = vmatprep.subr.mxu0 0.0
    %1236 = vmatpush1.msra.mxu0 0.0
    %1237 = vmatprep.subr.mxu0 0.0
    %1238 = vmatpush1.msra.mxu0 0.0
    %1239 = vmatprep.subr.mxu0 0.0
    %1240 = vmatpush1.msra.mxu0 0.0
    %1241 = vmatprep.subr.mxu0 0.0
    %1242 = vmatpush1.msra.mxu0 0.0
    %1243 = vmatprep.subr.mxu0 0.0
    %1244 = vmatpush1.msra.mxu0 0.0
    %1245 = vmatprep.subr.mxu0 0.0
    %1246 = vmatpush1.msra.mxu0 0.0
    %1247 = vmatprep.subr.mxu0 0.0
    %1248 = vmatpush1.msra.mxu0 0.0
    %1249 = vmatprep.subr.mxu0 0.0
    %1250 = vmatpush1.msra.mxu0 0.0
    %1251 = vmatprep.subr.mxu0 0.0
    %1252 = vmatpush1.msra.mxu0 0.0
    %1253 = vmatprep.subr.mxu0 0.0
    %1254 = vmatpush1.msra.mxu0 0.0
    %1255 = vmatprep.subr.mxu0 0.0
    %1256 = vmatpush1.msra.mxu0 0.0
    %1257 = vmatprep.subr.mxu0 0.0
    %1258 = vmatpush1.msra.mxu0 0.0
    %1259 = vmatprep.subr.mxu0 0.0
    %1260 = vmatpush1.msra.mxu0 0.0
    %1261 = vmatprep.subr.mxu0 0.0
    %1262 = vmatpush1.msra.mxu0 0.0
    %1263 = vmatprep.subr.mxu0 0.0
    %1264 = vmatpush1.msra.mxu0 0.0
    %1265 = vmatprep.subr.mxu0 0.0
    %1266 = vmatpush1.msra.mxu0 0.0
    %1267 = vmatprep.subr.mxu0 0.0
    %1268 = vmatpush1.msra.mxu0 0.0
    %1269 = vmatprep.subr.mxu0 0.0
    %1270 = vmatpush1.msra.mxu0 0.0
    %1271 = vmatprep.subr.mxu0 0.0
    %1272 = vmatpush1.msra.mxu0 0.0
    %1273 = vmatprep.subr.mxu0 0.0
    %1274 = vmatpush1.msra.mxu0 0.0
    %1275 = vmatprep.subr.mxu0 0.0
    %1276 = vmatpush1.msra.mxu0 0.0
    %1277 = vmatprep.subr.mxu0 0.0
    %1278 = vmatpush1.msra.mxu0 0.0
    %1279 = vmatprep.subr.mxu0 0.0
    %1280 = vmatpush1.msra.mxu0 0.0
    %1281 = vmatprep.subr.mxu0 0.0
    %1282 = vmatpush1.msra.mxu0 0.0
    %1283 = vmatprep.subr.mxu0 0.0
    %1284 = vmatpush1.msra.mxu0 0.0
    %1285 = vmatprep.subr.mxu0 0.0
    %1286 = vmatpush1.msra.mxu0 0.0
    %1287 = vmatprep.subr.mxu0 0.0
    %1288 = vmatpush1.msra.mxu0 0.0
    %1289 = vmatprep.subr.mxu0 0.0
    %1290 = vmatpush1.msra.mxu0 0.0
    %1291 = vmatprep.subr.mxu0 0.0
    %1292 = vmatpush1.msra.mxu0 0.0
    %1293 = vmatprep.subr.mxu0 0.0
    %1294 = vmatpush1.msra.mxu0 0.0
    %1295 = vmatprep.subr.mxu0 0.0
    %1296 = vmatpush1.msra.mxu0 0.0
    %1297 = vmatprep.mubr.f32.mxu0 0.0
    %1298 = vmatmul.mubr.f32.gmra.mrb[0].mxu0 %v1231
    %v1299 = vpop.f32.mrb[0].mxu0
    %v1300 = vadd.f32 0.0, %v1299
    %v1301 = vpop.f32.mrb[0].mxu0
    %1302 = vdwg.mxu0
    %1303 = vrot.lane.b32.xlu0 %v199, 48
    %v1304 = vpop.permute.xlu0 %1303
    %v1307 = vsel %vm211, %v1226, 0
    %1309 = vmatprep.subr.mxu0 0.0
    %1310 = vmatpush1.msra.mxu0 %v1304
    %1311 = vmatprep.subr.mxu0 0.0
    %1312 = vmatpush1.msra.mxu0 0.0
    %1313 = vmatprep.subr.mxu0 0.0
    %1314 = vmatpush1.msra.mxu0 0.0
    %1315 = vmatprep.subr.mxu0 0.0
    %1316 = vmatpush1.msra.mxu0 0.0
    %1317 = vmatprep.subr.mxu0 0.0
    %1318 = vmatpush1.msra.mxu0 0.0
    %1319 = vmatprep.subr.mxu0 0.0
    %1320 = vmatpush1.msra.mxu0 0.0
    %1321 = vmatprep.subr.mxu0 0.0
    %1322 = vmatpush1.msra.mxu0 0.0
    %1323 = vmatprep.subr.mxu0 0.0
    %1324 = vmatpush1.msra.mxu0 0.0
    %1325 = vmatprep.subr.mxu0 0.0
    %1326 = vmatpush1.msra.mxu0 0.0
    %1327 = vmatprep.subr.mxu0 0.0
    %1328 = vmatpush1.msra.mxu0 0.0
    %1329 = vmatprep.subr.mxu0 0.0
    %1330 = vmatpush1.msra.mxu0 0.0
    %1331 = vmatprep.subr.mxu0 0.0
    %1332 = vmatpush1.msra.mxu0 0.0
    %1333 = vmatprep.subr.mxu0 0.0
    %1334 = vmatpush1.msra.mxu0 0.0
    %1335 = vmatprep.subr.mxu0 0.0
    %1336 = vmatpush1.msra.mxu0 0.0
    %1337 = vmatprep.subr.mxu0 0.0
    %1338 = vmatpush1.msra.mxu0 0.0
    %1339 = vmatprep.subr.mxu0 0.0
    %1340 = vmatpush1.msra.mxu0 0.0
    %1341 = vmatprep.subr.mxu0 0.0
    %1342 = vmatpush1.msra.mxu0 0.0
    %1343 = vmatprep.subr.mxu0 0.0
    %1344 = vmatpush1.msra.mxu0 0.0
    %1345 = vmatprep.subr.mxu0 0.0
    %1346 = vmatpush1.msra.mxu0 0.0
    %1347 = vmatprep.subr.mxu0 0.0
    %1348 = vmatpush1.msra.mxu0 0.0
    %1349 = vmatprep.subr.mxu0 0.0
    %1350 = vmatpush1.msra.mxu0 0.0
    %1351 = vmatprep.subr.mxu0 0.0
    %1352 = vmatpush1.msra.mxu0 0.0
    %1353 = vmatprep.subr.mxu0 0.0
    %1354 = vmatpush1.msra.mxu0 0.0
    %1355 = vmatprep.subr.mxu0 0.0
    %1356 = vmatpush1.msra.mxu0 0.0
    %1357 = vmatprep.subr.mxu0 0.0
    %1358 = vmatpush1.msra.mxu0 0.0
    %1359 = vmatprep.subr.mxu0 0.0
    %1360 = vmatpush1.msra.mxu0 0.0
    %1361 = vmatprep.subr.mxu0 0.0
    %1362 = vmatpush1.msra.mxu0 0.0
    %1363 = vmatprep.subr.mxu0 0.0
    %1364 = vmatpush1.msra.mxu0 0.0
    %1365 = vmatprep.subr.mxu0 0.0
    %1366 = vmatpush1.msra.mxu0 0.0
    %1367 = vmatprep.subr.mxu0 0.0
    %1368 = vmatpush1.msra.mxu0 0.0
    %1369 = vmatprep.subr.mxu0 0.0
    %1370 = vmatpush1.msra.mxu0 0.0
    %1371 = vmatprep.subr.mxu0 0.0
    %1372 = vmatpush1.msra.mxu0 0.0
    %1373 = vmatprep.mubr.f32.mxu0 0.0
    %1374 = vmatmul.mubr.f32.gmra.mrb[0].mxu0 %v1307
    %v1375 = vpop.f32.mrb[0].mxu0
    %v1376 = vadd.f32 0.0, %v1375
    %v1377 = vpop.f32.mrb[0].mxu0
    %1378 = vdwg.mxu0
    %v1379 = vld [vmem:[#allocation5 + $0x30] sm:$0xff]
    %v1381 = vsel %vm211, %v1300, 0
    %v1384 = vsel %vm211, %v1376, 0
    %1386 = vmatprep.subr.mxu0 0.0
    %1387 = vmatpush1.msra.mxu0 %v1379
    %1388 = vmatprep.subr.mxu0 0.0
    %1389 = vmatpush1.msra.mxu0 0.0
    %1390 = vmatprep.subr.mxu0 0.0
    %1391 = vmatpush1.msra.mxu0 0.0
    %1392 = vmatprep.subr.mxu0 0.0
    %1393 = vmatpush1.msra.mxu0 0.0
    %1394 = vmatprep.subr.mxu0 0.0
    %1395 = vmatpush1.msra.mxu0 0.0
    %1396 = vmatprep.subr.mxu0 0.0
    %1397 = vmatpush1.msra.mxu0 0.0
    %1398 = vmatprep.subr.mxu0 0.0
    %1399 = vmatpush1.msra.mxu0 0.0
    %1400 = vmatprep.subr.mxu0 0.0
    %1401 = vmatpush1.msra.mxu0 0.0
    %1402 = vmatprep.subr.mxu0 0.0
    %1403 = vmatpush1.msra.mxu0 0.0
    %1404 = vmatprep.subr.mxu0 0.0
    %1405 = vmatpush1.msra.mxu0 0.0
    %1406 = vmatprep.subr.mxu0 0.0
    %1407 = vmatpush1.msra.mxu0 0.0
    %1408 = vmatprep.subr.mxu0 0.0
    %1409 = vmatpush1.msra.mxu0 0.0
    %1410 = vmatprep.subr.mxu0 0.0
    %1411 = vmatpush1.msra.mxu0 0.0
    %1412 = vmatprep.subr.mxu0 0.0
    %1413 = vmatpush1.msra.mxu0 0.0
    %1414 = vmatprep.subr.mxu0 0.0
    %1415 = vmatpush1.msra.mxu0 0.0
    %1416 = vmatprep.subr.mxu0 0.0
    %1417 = vmatpush1.msra.mxu0 0.0
    %1418 = vmatprep.subr.mxu0 0.0
    %1419 = vmatpush1.msra.mxu0 0.0
    %1420 = vmatprep.subr.mxu0 0.0
    %1421 = vmatpush1.msra.mxu0 0.0
    %1422 = vmatprep.subr.mxu0 0.0
    %1423 = vmatpush1.msra.mxu0 0.0
    %1424 = vmatprep.subr.mxu0 0.0
    %1425 = vmatpush1.msra.mxu0 0.0
    %1426 = vmatprep.subr.mxu0 0.0
    %1427 = vmatpush1.msra.mxu0 0.0
    %1428 = vmatprep.subr.mxu0 0.0
    %1429 = vmatpush1.msra.mxu0 0.0
    %1430 = vmatprep.subr.mxu0 0.0
    %1431 = vmatpush1.msra.mxu0 0.0
    %1432 = vmatprep.subr.mxu0 0.0
    %1433 = vmatpush1.msra.mxu0 0.0
    %1434 = vmatprep.subr.mxu0 0.0
    %1435 = vmatpush1.msra.mxu0 0.0
    %1436 = vmatprep.subr.mxu0 0.0
    %1437 = vmatpush1.msra.mxu0 0.0
    %1438 = vmatprep.subr.mxu0 0.0
    %1439 = vmatpush1.msra.mxu0 0.0
    %1440 = vmatprep.subr.mxu0 0.0
    %1441 = vmatpush1.msra.mxu0 0.0
    %1442 = vmatprep.subr.mxu0 0.0
    %1443 = vmatpush1.msra.mxu0 0.0
    %1444 = vmatprep.subr.mxu0 0.0
    %1445 = vmatpush1.msra.mxu0 0.0
    %1446 = vmatprep.subr.mxu0 0.0
    %1447 = vmatpush1.msra.mxu0 0.0
    %1448 = vmatprep.subr.mxu0 0.0
    %1449 = vmatpush1.msra.mxu0 0.0
    %1450 = vmatprep.mubr.f32.mxu0 0.0
    %1451 = vmatmul.mubr.f32.gmra.mrb[0].mxu0 %v1381
    %v1452 = vpop.f32.mrb[0].mxu0
    %v1453 = vadd.f32 0.0, %v1452
    %v1454 = vpop.f32.mrb[0].mxu0
    %1455 = vmatprep.mubr.f32.mxu0 0.0
    %1456 = vmatmul.mubr.f32.gmra.mrb[0].mxu0 %v1384
    %v1457 = vpop.f32.mrb[0].mxu0
    %v1458 = vadd.f32 0.0, %v1457
    %v1459 = vpop.f32.mrb[0].mxu0
    %1460 = vdwg.mxu0
    %v1461 = vadd.f32 %v1035, %v1453
    %v1462 = vadd.f32 %v1040, %v1458
    %1463 = vrot.lane.b32.xlu0 %v194, 104
    %v1464 = vpop.permute.xlu0 %1463
    %1465 = vrot.lane.b32.xlu0 %v194, 72
    %v1466 = vpop.permute.xlu0 %1465
    %v1467 = vsel %vm211, %v1464, 0
    %v1469 = vsel %vm211, %v1466, 0
    %1471 = vmatprep.subr.mxu0 0.0
    %1472 = vmatpush1.xpose.msra.mxu0 %v1469
    %1473 = vmatprep.subr.mxu0 0.0
    %1474 = vmatpush1.xpose.msra.mxu0 0.0
    %1475 = vmatprep.subr.mxu0 0.0
    %1476 = vmatpush1.xpose.msra.mxu0 0.0
    %1477 = vmatprep.subr.mxu0 0.0
    %1478 = vmatpush1.xpose.msra.mxu0 0.0
    %1479 = vmatprep.subr.mxu0 0.0
    %1480 = vmatpush1.xpose.msra.mxu0 0.0
    %1481 = vmatprep.subr.mxu0 0.0
    %1482 = vmatpush1.xpose.msra.mxu0 0.0
    %1483 = vmatprep.subr.mxu0 0.0
    %1484 = vmatpush1.xpose.msra.mxu0 0.0
    %1485 = vmatprep.subr.mxu0 0.0
    %1486 = vmatpush1.xpose.msra.mxu0 0.0
    %1487 = vmatprep.subr.mxu0 0.0
    %1488 = vmatpush1.xpose.msra.mxu0 0.0
    %1489 = vmatprep.subr.mxu0 0.0
    %1490 = vmatpush1.xpose.msra.mxu0 0.0
    %1491 = vmatprep.subr.mxu0 0.0
    %1492 = vmatpush1.xpose.msra.mxu0 0.0
    %1493 = vmatprep.subr.mxu0 0.0
    %1494 = vmatpush1.xpose.msra.mxu0 0.0
    %1495 = vmatprep.subr.mxu0 0.0
    %1496 = vmatpush1.xpose.msra.mxu0 0.0
    %1497 = vmatprep.subr.mxu0 0.0
    %1498 = vmatpush1.xpose.msra.mxu0 0.0
    %1499 = vmatprep.subr.mxu0 0.0
    %1500 = vmatpush1.xpose.msra.mxu0 0.0
    %1501 = vmatprep.subr.mxu0 0.0
    %1502 = vmatpush1.xpose.msra.mxu0 0.0
    %1503 = vmatprep.subr.mxu0 0.0
    %1504 = vmatpush1.xpose.msra.mxu0 0.0
    %1505 = vmatprep.subr.mxu0 0.0
    %1506 = vmatpush1.xpose.msra.mxu0 0.0
    %1507 = vmatprep.subr.mxu0 0.0
    %1508 = vmatpush1.xpose.msra.mxu0 0.0
    %1509 = vmatprep.subr.mxu0 0.0
    %1510 = vmatpush1.xpose.msra.mxu0 0.0
    %1511 = vmatprep.subr.mxu0 0.0
    %1512 = vmatpush1.xpose.msra.mxu0 0.0
    %1513 = vmatprep.subr.mxu0 0.0
    %1514 = vmatpush1.xpose.msra.mxu0 0.0
    %1515 = vmatprep.subr.mxu0 0.0
    %1516 = vmatpush1.xpose.msra.mxu0 0.0
    %1517 = vmatprep.subr.mxu0 0.0
    %1518 = vmatpush1.xpose.msra.mxu0 0.0
    %1519 = vmatprep.subr.mxu0 0.0
    %1520 = vmatpush1.xpose.msra.mxu0 0.0
    %1521 = vmatprep.subr.mxu0 0.0
    %1522 = vmatpush1.xpose.msra.mxu0 0.0
    %1523 = vmatprep.subr.mxu0 0.0
    %1524 = vmatpush1.xpose.msra.mxu0 0.0
    %1525 = vmatprep.subr.mxu0 0.0
    %1526 = vmatpush1.xpose.msra.mxu0 0.0
    %1527 = vmatprep.subr.mxu0 0.0
    %1528 = vmatpush1.xpose.msra.mxu0 0.0
    %1529 = vmatprep.subr.mxu0 0.0
    %1530 = vmatpush1.xpose.msra.mxu0 0.0
    %1531 = vmatprep.subr.mxu0 0.0
    %1532 = vmatpush1.xpose.msra.mxu0 0.0
    %1533 = vmatprep.subr.mxu0 0.0
    %1534 = vmatpush1.xpose.msra.mxu0 0.0
    %1535 = vmatprep.mubr.f32.mxu0 0.0
    %1536 = vmatmul.mubr.f32.gmra.mrb[0].mxu0 %v1467
    %v1537 = vpop.f32.mrb[0].mxu0
    %v1538 = vadd.f32 %v207, %v1537
    %v1539 = vpop.f32.mrb[0].mxu0
    %1540 = vdwg.mxu0
    %1541 = vrot.lane.b32.xlu0 %v199, 104
    %v1542 = vpop.permute.xlu0 %1541
    %1543 = vrot.lane.b32.xlu0 %v199, 72
    %v1544 = vpop.permute.xlu0 %1543
    %v1545 = vsel %vm211, %v1542, 0
    %v1547 = vsel %vm211, %v1544, 0
    %1549 = vmatprep.subr.mxu0 0.0
    %1550 = vmatpush1.xpose.msra.mxu0 %v1547
    %1551 = vmatprep.subr.mxu0 0.0
    %1552 = vmatpush1.xpose.msra.mxu0 0.0
    %1553 = vmatprep.subr.mxu0 0.0
    %1554 = vmatpush1.xpose.msra.mxu0 0.0
    %1555 = vmatprep.subr.mxu0 0.0
    %1556 = vmatpush1.xpose.msra.mxu0 0.0
    %1557 = vmatprep.subr.mxu0 0.0
    %1558 = vmatpush1.xpose.msra.mxu0 0.0
    %1559 = vmatprep.subr.mxu0 0.0
    %1560 = vmatpush1.xpose.msra.mxu0 0.0
    %1561 = vmatprep.subr.mxu0 0.0
    %1562 = vmatpush1.xpose.msra.mxu0 0.0
    %1563 = vmatprep.subr.mxu0 0.0
    %1564 = vmatpush1.xpose.msra.mxu0 0.0
    %1565 = vmatprep.subr.mxu0 0.0
    %1566 = vmatpush1.xpose.msra.mxu0 0.0
    %1567 = vmatprep.subr.mxu0 0.0
    %1568 = vmatpush1.xpose.msra.mxu0 0.0
    %1569 = vmatprep.subr.mxu0 0.0
    %1570 = vmatpush1.xpose.msra.mxu0 0.0
    %1571 = vmatprep.subr.mxu0 0.0
    %1572 = vmatpush1.xpose.msra.mxu0 0.0
    %1573 = vmatprep.subr.mxu0 0.0
    %1574 = vmatpush1.xpose.msra.mxu0 0.0
    %1575 = vmatprep.subr.mxu0 0.0
    %1576 = vmatpush1.xpose.msra.mxu0 0.0
    %1577 = vmatprep.subr.mxu0 0.0
    %1578 = vmatpush1.xpose.msra.mxu0 0.0
    %1579 = vmatprep.subr.mxu0 0.0
    %1580 = vmatpush1.xpose.msra.mxu0 0.0
    %1581 = vmatprep.subr.mxu0 0.0
    %1582 = vmatpush1.xpose.msra.mxu0 0.0
    %1583 = vmatprep.subr.mxu0 0.0
    %1584 = vmatpush1.xpose.msra.mxu0 0.0
    %1585 = vmatprep.subr.mxu0 0.0
    %1586 = vmatpush1.xpose.msra.mxu0 0.0
    %1587 = vmatprep.subr.mxu0 0.0
    %1588 = vmatpush1.xpose.msra.mxu0 0.0
    %1589 = vmatprep.subr.mxu0 0.0
    %1590 = vmatpush1.xpose.msra.mxu0 0.0
    %1591 = vmatprep.subr.mxu0 0.0
    %1592 = vmatpush1.xpose.msra.mxu0 0.0
    %1593 = vmatprep.subr.mxu0 0.0
    %1594 = vmatpush1.xpose.msra.mxu0 0.0
    %1595 = vmatprep.subr.mxu0 0.0
    %1596 = vmatpush1.xpose.msra.mxu0 0.0
    %1597 = vmatprep.subr.mxu0 0.0
    %1598 = vmatpush1.xpose.msra.mxu0 0.0
    %1599 = vmatprep.subr.mxu0 0.0
    %1600 = vmatpush1.xpose.msra.mxu0 0.0
    %1601 = vmatprep.subr.mxu0 0.0
    %1602 = vmatpush1.xpose.msra.mxu0 0.0
    %1603 = vmatprep.subr.mxu0 0.0
    %1604 = vmatpush1.xpose.msra.mxu0 0.0
    %1605 = vmatprep.subr.mxu0 0.0
    %1606 = vmatpush1.xpose.msra.mxu0 0.0
    %1607 = vmatprep.subr.mxu0 0.0
    %1608 = vmatpush1.xpose.msra.mxu0 0.0
    %1609 = vmatprep.subr.mxu0 0.0
    %1610 = vmatpush1.xpose.msra.mxu0 0.0
    %1611 = vmatprep.subr.mxu0 0.0
    %1612 = vmatpush1.xpose.msra.mxu0 0.0
    %1613 = vmatprep.mubr.f32.mxu0 0.0
    %1614 = vmatmul.mubr.f32.gmra.mrb[0].mxu0 %v1545
    %v1615 = vpop.f32.mrb[0].mxu0
    %v1616 = vadd.f32 %v207, %v1615
    %v1617 = vpop.f32.mrb[0].mxu0
    %1618 = vdwg.mxu0
    %v1619 = vsel %vm211, %v1538, -inf
    %1620 = vmax.xlane.f32.xlu0 %v1619
    %v1621 = vpop.xlane.xlu0 %1620
    %v1622 = vsel %vm211, %v1616, -inf
    %1623 = vmax.xlane.f32.xlu0 %v1622
    %v1624 = vpop.xlane.xlu0 %1623
    %v1625 = vsub.f32 %v1538, %v1621
    %v1626 = vsub.f32 %v1616, %v1624
    %v1627 = vmul.f32 %v1625, 1.442695
    %v1628 = vpow.pop %v1627
    %v1629 = vmul.f32 %v1626, 1.442695
    %v1630 = vpow.pop %v1629
    %v1631 = vsel %vm211, %v1628, 0.0
    %1632 = vadd.xlane.f32.xlu0 %v1631
    %v1633 = vpop.xlane.xlu0 %1632
    %v1634 = vsel %vm211, %v1630, 0.0
    %1635 = vadd.xlane.f32.xlu0 %v1634
    %v1636 = vpop.xlane.xlu0 %1635
    %v1637 = vrcp.pop %v1633
    %v1638 = vrcp.pop %v1636
    %v1639 = vmul.f32 %v1633, %v1637
    %v1640 = vmul.f32 %v1636, %v1638
    %v1641 = vsub.f32 2.0, %v1639
    %v1642 = vsub.f32 2.0, %v1640
    %v1643 = vmul.f32 %v1637, %v1641
    %v1644 = vmul.f32 %v1638, %v1642
    %v1645 = vmul.f32 %v1628, %v1643
    %v1646 = vmul.f32 %v1630, %v1644
    %1647 = vrot.lane.b32.xlu0 %v194, 40
    %v1648 = vpop.permute.xlu0 %1647
    %v1651 = vsel %vm211, %v1645, 0
    %1653 = vmatprep.subr.mxu0 0.0
    %1654 = vmatpush1.msra.mxu0 %v1648
    %1655 = vmatprep.subr.mxu0 0.0
    %1656 = vmatpush1.msra.mxu0 0.0
    %1657 = vmatprep.subr.mxu0 0.0
    %1658 = vmatpush1.msra.mxu0 0.0
    %1659 = vmatprep.subr.mxu0 0.0
    %1660 = vmatpush1.msra.mxu0 0.0
    %1661 = vmatprep.subr.mxu0 0.0
    %1662 = vmatpush1.msra.mxu0 0.0
    %1663 = vmatprep.subr.mxu0 0.0
    %1664 = vmatpush1.msra.mxu0 0.0
    %1665 = vmatprep.subr.mxu0 0.0
    %1666 = vmatpush1.msra.mxu0 0.0
    %1667 = vmatprep.subr.mxu0 0.0
    %1668 = vmatpush1.msra.mxu0 0.0
    %1669 = vmatprep.subr.mxu0 0.0
    %1670 = vmatpush1.msra.mxu0 0.0
    %1671 = vmatprep.subr.mxu0 0.0
    %1672 = vmatpush1.msra.mxu0 0.0
    %1673 = vmatprep.subr.mxu0 0.0
    %1674 = vmatpush1.msra.mxu0 0.0
    %1675 = vmatprep.subr.mxu0 0.0
    %1676 = vmatpush1.msra.mxu0 0.0
    %1677 = vmatprep.subr.mxu0 0.0
    %1678 = vmatpush1.msra.mxu0 0.0
    %1679 = vmatprep.subr.mxu0 0.0
    %1680 = vmatpush1.msra.mxu0 0.0
    %1681 = vmatprep.subr.mxu0 0.0
    %1682 = vmatpush1.msra.mxu0 0.0
    %1683 = vmatprep.subr.mxu0 0.0
    %1684 = vmatpush1.msra.mxu0 0.0
    %1685 = vmatprep.subr.mxu0 0.0
    %1686 = vmatpush1.msra.mxu0 0.0
    %1687 = vmatprep.subr.mxu0 0.0
    %1688 = vmatpush1.msra.mxu0 0.0
    %1689 = vmatprep.subr.mxu0 0.0
    %1690 = vmatpush1.msra.mxu0 0.0
    %1691 = vmatprep.subr.mxu0 0.0
    %1692 = vmatpush1.msra.mxu0 0.0
    %1693 = vmatprep.subr.mxu0 0.0
    %1694 = vmatpush1.msra.mxu0 0.0
    %1695 = vmatprep.subr.mxu0 0.0
    %1696 = vmatpush1.msra.mxu0 0.0
    %1697 = vmatprep.subr.mxu0 0.0
    %1698 = vmatpush1.msra.mxu0 0.0
    %1699 = vmatprep.subr.mxu0 0.0
    %1700 = vmatpush1.msra.mxu0 0.0
    %1701 = vmatprep.subr.mxu0 0.0
    %1702 = vmatpush1.msra.mxu0 0.0
    %1703 = vmatprep.subr.mxu0 0.0
    %1704 = vmatpush1.msra.mxu0 0.0
    %1705 = vmatprep.subr.mxu0 0.0
    %1706 = vmatpush1.msra.mxu0 0.0
    %1707 = vmatprep.subr.mxu0 0.0
    %1708 = vmatpush1.msra.mxu0 0.0
    %1709 = vmatprep.subr.mxu0 0.0
    %1710 = vmatpush1.msra.mxu0 0.0
    %1711 = vmatprep.subr.mxu0 0.0
    %1712 = vmatpush1.msra.mxu0 0.0
    %1713 = vmatprep.subr.mxu0 0.0
    %1714 = vmatpush1.msra.mxu0 0.0
    %1715 = vmatprep.subr.mxu0 0.0
    %1716 = vmatpush1.msra.mxu0 0.0
    %1717 = vmatprep.mubr.f32.mxu0 0.0
    %1718 = vmatmul.mubr.f32.gmra.mrb[0].mxu0 %v1651
    %v1719 = vpop.f32.mrb[0].mxu0
    %v1720 = vadd.f32 0.0, %v1719
    %v1721 = vpop.f32.mrb[0].mxu0
    %1722 = vdwg.mxu0
    %1723 = vrot.lane.b32.xlu0 %v199, 40
    %v1724 = vpop.permute.xlu0 %1723
    %v1727 = vsel %vm211, %v1646, 0
    %1729 = vmatprep.subr.mxu0 0.0
    %1730 = vmatpush1.msra.mxu0 %v1724
    %1731 = vmatprep.subr.mxu0 0.0
    %1732 = vmatpush1.msra.mxu0 0.0
    %1733 = vmatprep.subr.mxu0 0.0
    %1734 = vmatpush1.msra.mxu0 0.0
    %1735 = vmatprep.subr.mxu0 0.0
    %1736 = vmatpush1.msra.mxu0 0.0
    %1737 = vmatprep.subr.mxu0 0.0
    %1738 = vmatpush1.msra.mxu0 0.0
    %1739 = vmatprep.subr.mxu0 0.0
    %1740 = vmatpush1.msra.mxu0 0.0
    %1741 = vmatprep.subr.mxu0 0.0
    %1742 = vmatpush1.msra.mxu0 0.0
    %1743 = vmatprep.subr.mxu0 0.0
    %1744 = vmatpush1.msra.mxu0 0.0
    %1745 = vmatprep.subr.mxu0 0.0
    %1746 = vmatpush1.msra.mxu0 0.0
    %1747 = vmatprep.subr.mxu0 0.0
    %1748 = vmatpush1.msra.mxu0 0.0
    %1749 = vmatprep.subr.mxu0 0.0
    %1750 = vmatpush1.msra.mxu0 0.0
    %1751 = vmatprep.subr.mxu0 0.0
    %1752 = vmatpush1.msra.mxu0 0.0
    %1753 = vmatprep.subr.mxu0 0.0
    %1754 = vmatpush1.msra.mxu0 0.0
    %1755 = vmatprep.subr.mxu0 0.0
    %1756 = vmatpush1.msra.mxu0 0.0
    %1757 = vmatprep.subr.mxu0 0.0
    %1758 = vmatpush1.msra.mxu0 0.0
    %1759 = vmatprep.subr.mxu0 0.0
    %1760 = vmatpush1.msra.mxu0 0.0
    %1761 = vmatprep.subr.mxu0 0.0
    %1762 = vmatpush1.msra.mxu0 0.0
    %1763 = vmatprep.subr.mxu0 0.0
    %1764 = vmatpush1.msra.mxu0 0.0
    %1765 = vmatprep.subr.mxu0 0.0
    %1766 = vmatpush1.msra.mxu0 0.0
    %1767 = vmatprep.subr.mxu0 0.0
    %1768 = vmatpush1.msra.mxu0 0.0
    %1769 = vmatprep.subr.mxu0 0.0
    %1770 = vmatpush1.msra.mxu0 0.0
    %1771 = vmatprep.subr.mxu0 0.0
    %1772 = vmatpush1.msra.mxu0 0.0
    %1773 = vmatprep.subr.mxu0 0.0
    %1774 = vmatpush1.msra.mxu0 0.0
    %1775 = vmatprep.subr.mxu0 0.0
    %1776 = vmatpush1.msra.mxu0 0.0
    %1777 = vmatprep.subr.mxu0 0.0
    %1778 = vmatpush1.msra.mxu0 0.0
    %1779 = vmatprep.subr.mxu0 0.0
    %1780 = vmatpush1.msra.mxu0 0.0
    %1781 = vmatprep.subr.mxu0 0.0
    %1782 = vmatpush1.msra.mxu0 0.0
    %1783 = vmatprep.subr.mxu0 0.0
    %1784 = vmatpush1.msra.mxu0 0.0
    %1785 = vmatprep.subr.mxu0 0.0
    %1786 = vmatpush1.msra.mxu0 0.0
    %1787 = vmatprep.subr.mxu0 0.0
    %1788 = vmatpush1.msra.mxu0 0.0
    %1789 = vmatprep.subr.mxu0 0.0
    %1790 = vmatpush1.msra.mxu0 0.0
    %1791 = vmatprep.subr.mxu0 0.0
    %1792 = vmatpush1.msra.mxu0 0.0
    %1793 = vmatprep.mubr.f32.mxu0 0.0
    %1794 = vmatmul.mubr.f32.gmra.mrb[0].mxu0 %v1727
    %v1795 = vpop.f32.mrb[0].mxu0
    %v1796 = vadd.f32 0.0, %v1795
    %v1797 = vpop.f32.mrb[0].mxu0
    %1798 = vdwg.mxu0
    %v1799 = vld [vmem:[#allocation5 + $0x38] sm:$0xff]
    %v1801 = vsel %vm211, %v1720, 0
    %v1804 = vsel %vm211, %v1796, 0
    %1806 = vmatprep.subr.mxu0 0.0
    %1807 = vmatpush1.msra.mxu0 %v1799
    %1808 = vmatprep.subr.mxu0 0.0
    %1809 = vmatpush1.msra.mxu0 0.0
    %1810 = vmatprep.subr.mxu0 0.0
    %1811 = vmatpush1.msra.mxu0 0.0
    %1812 = vmatprep.subr.mxu0 0.0
    %1813 = vmatpush1.msra.mxu0 0.0
    %1814 = vmatprep.subr.mxu0 0.0
    %1815 = vmatpush1.msra.mxu0 0.0
    %1816 = vmatprep.subr.mxu0 0.0
    %1817 = vmatpush1.msra.mxu0 0.0
    %1818 = vmatprep.subr.mxu0 0.0
    %1819 = vmatpush1.msra.mxu0 0.0
    %1820 = vmatprep.subr.mxu0 0.0
    %1821 = vmatpush1.msra.mxu0 0.0
    %1822 = vmatprep.subr.mxu0 0.0
    %1823 = vmatpush1.msra.mxu0 0.0
    %1824 = vmatprep.subr.mxu0 0.0
    %1825 = vmatpush1.msra.mxu0 0.0
    %1826 = vmatprep.subr.mxu0 0.0
    %1827 = vmatpush1.msra.mxu0 0.0
    %1828 = vmatprep.subr.mxu0 0.0
    %1829 = vmatpush1.msra.mxu0 0.0
    %1830 = vmatprep.subr.mxu0 0.0
    %1831 = vmatpush1.msra.mxu0 0.0
    %1832 = vmatprep.subr.mxu0 0.0
    %1833 = vmatpush1.msra.mxu0 0.0
    %1834 = vmatprep.subr.mxu0 0.0
    %1835 = vmatpush1.msra.mxu0 0.0
    %1836 = vmatprep.subr.mxu0 0.0
    %1837 = vmatpush1.msra.mxu0 0.0
    %1838 = vmatprep.subr.mxu0 0.0
    %1839 = vmatpush1.msra.mxu0 0.0
    %1840 = vmatprep.subr.mxu0 0.0
    %1841 = vmatpush1.msra.mxu0 0.0
    %1842 = vmatprep.subr.mxu0 0.0
    %1843 = vmatpush1.msra.mxu0 0.0
    %1844 = vmatprep.subr.mxu0 0.0
    %1845 = vmatpush1.msra.mxu0 0.0
    %1846 = vmatprep.subr.mxu0 0.0
    %1847 = vmatpush1.msra.mxu0 0.0
    %1848 = vmatprep.subr.mxu0 0.0
    %1849 = vmatpush1.msra.mxu0 0.0
    %1850 = vmatprep.subr.mxu0 0.0
    %1851 = vmatpush1.msra.mxu0 0.0
    %1852 = vmatprep.subr.mxu0 0.0
    %1853 = vmatpush1.msra.mxu0 0.0
    %1854 = vmatprep.subr.mxu0 0.0
    %1855 = vmatpush1.msra.mxu0 0.0
    %1856 = vmatprep.subr.mxu0 0.0
    %1857 = vmatpush1.msra.mxu0 0.0
    %1858 = vmatprep.subr.mxu0 0.0
    %1859 = vmatpush1.msra.mxu0 0.0
    %1860 = vmatprep.subr.mxu0 0.0
    %1861 = vmatpush1.msra.mxu0 0.0
    %1862 = vmatprep.subr.mxu0 0.0
    %1863 = vmatpush1.msra.mxu0 0.0
    %1864 = vmatprep.subr.mxu0 0.0
    %1865 = vmatpush1.msra.mxu0 0.0
    %1866 = vmatprep.subr.mxu0 0.0
    %1867 = vmatpush1.msra.mxu0 0.0
    %1868 = vmatprep.subr.mxu0 0.0
    %1869 = vmatpush1.msra.mxu0 0.0
    %1870 = vmatprep.mubr.f32.mxu0 0.0
    %1871 = vmatmul.mubr.f32.gmra.mrb[0].mxu0 %v1801
    %v1872 = vpop.f32.mrb[0].mxu0
    %v1873 = vadd.f32 0.0, %v1872
    %v1874 = vpop.f32.mrb[0].mxu0
    %1875 = vmatprep.mubr.f32.mxu0 0.0
    %1876 = vmatmul.mubr.f32.gmra.mrb[0].mxu0 %v1804
    %v1877 = vpop.f32.mrb[0].mxu0
    %v1878 = vadd.f32 0.0, %v1877
    %v1879 = vpop.f32.mrb[0].mxu0
    %1880 = vdwg.mxu0
    %v1881 = vadd.f32 %v1461, %v1873
    %v1882 = vadd.f32 %v1462, %v1878
    %v1883 = vlaneseq
    %v1884 = vshrl.u32 %v1883, 7
    %v1885 = vsub.s32 0, %v1884
    %v1886 = vrot.slane %v48, %v1885
    %v1887 = vadd.f32 %v1881, %v1886
    %v1888 = vadd.f32 %v1882, %v1886
    %v1889 = vadd.f32 %v43, %v1887
    %v1890 = vadd.f32 %v44, %v1888
    %v1891 = vsel %vm77, %v1889, 0.0
    %1892 = vadd.xlane.f32.xlu0 %v1891
    %v1893 = vpop.xlane.xlu0 %1892
    %v1894 = vsel %vm77, %v1890, 0.0
    %1895 = vadd.xlane.f32.xlu0 %v1894
    %v1896 = vpop.xlane.xlu0 %1895
    %v1897 = vmul.f32 %v1893, %v84
    %v1898 = vmul.f32 %v1896, %v84
    %v1899 = vsub.f32 %v1889, %v1897
    %v1900 = vsub.f32 %v1890, %v1898
    %v1901 = vmul.f32 %v1899, %v1899
    %v1902 = vmul.f32 %v1900, %v1900
    %v1903 = vsel %vm77, %v1901, 0.0
    %1904 = vadd.xlane.f32.xlu0 %v1903
    %v1905 = vpop.xlane.xlu0 %1904
    %v1906 = vsel %vm77, %v1902, 0.0
    %1907 = vadd.xlane.f32.xlu0 %v1906
    %v1908 = vpop.xlane.xlu0 %1907
    %v1909 = vmul.f32 %v1905, %v84
    %v1910 = vmul.f32 %v1908, %v84
    %v1911 = vadd.f32 %v1909, 1e-05
    %v1912 = vadd.f32 %v1910, 1e-05
    %v1913 = vrsqrt.pop %v1911
    %v1914 = vrsqrt.pop %v1912
    %v1915 = vmul.f32 %v1899, %v1913
    %v1916 = vmul.f32 %v1900, %v1914
    %v1917 = vlaneseq
    %v1918 = vshrl.u32 %v1917, 7
    %v1919 = vsub.s32 0, %v1918
    %v1920 = vrot.slane %v49, %v1919
    %v1921 = vmul.f32 %v1915, %v1920
    %v1922 = vmul.f32 %v1916, %v1920
    %v1923 = vlaneseq
    %v1924 = vshrl.u32 %v1923, 7
    %v1925 = vsub.s32 0, %v1924
    %v1926 = vrot.slane %v50, %v1925
    %v1927 = vadd.f32 %v1921, %v1926
    %v1928 = vadd.f32 %v1922, %v1926
    %v1929 = vlaneseq
    %v1930 = vshrl.u32 %v1929, 7
    %v1931 = vsub.s32 0, %v1930
    %v1932 = vrot.slane %v51, %v1931
    %v1934 = vsel %vm77, %v1927, 0
    %v1937 = vsel %vm77, %v1928, 0
    %1939 = vmatprep.subr.mxu0 0.0
    %1940 = vmatpush1.msra.mxu0 %v57
    %1941 = vmatprep.subr.mxu0 0.0
    %1942 = vmatpush1.msra.mxu0 %v58
    %1943 = vmatprep.subr.mxu0 0.0
    %1944 = vmatpush1.msra.mxu0 %v59
    %1945 = vmatprep.subr.mxu0 0.0
    %1946 = vmatpush1.msra.mxu0 %v60
    %1947 = vmatprep.subr.mxu0 0.0
    %1948 = vmatpush1.msra.mxu0 0.0
    %1949 = vmatprep.subr.mxu0 0.0
    %1950 = vmatpush1.msra.mxu0 0.0
    %1951 = vmatprep.subr.mxu0 0.0
    %1952 = vmatpush1.msra.mxu0 0.0
    %1953 = vmatprep.subr.mxu0 0.0
    %1954 = vmatpush1.msra.mxu0 0.0
    %1955 = vmatprep.subr.mxu0 0.0
    %1956 = vmatpush1.msra.mxu0 0.0
    %1957 = vmatprep.subr.mxu0 0.0
    %1958 = vmatpush1.msra.mxu0 0.0
    %1959 = vmatprep.subr.mxu0 0.0
    %1960 = vmatpush1.msra.mxu0 0.0
    %1961 = vmatprep.subr.mxu0 0.0
    %1962 = vmatpush1.msra.mxu0 0.0
    %1963 = vmatprep.subr.mxu0 0.0
    %1964 = vmatpush1.msra.mxu0 0.0
    %1965 = vmatprep.subr.mxu0 0.0
    %1966 = vmatpush1.msra.mxu0 0.0
    %1967 = vmatprep.subr.mxu0 0.0
    %1968 = vmatpush1.msra.mxu0 0.0
    %1969 = vmatprep.subr.mxu0 0.0
    %1970 = vmatpush1.msra.mxu0 0.0
    %1971 = vmatprep.subr.mxu0 0.0
    %1972 = vmatpush1.msra.mxu0 0.0
    %1973 = vmatprep.subr.mxu0 0.0
    %1974 = vmatpush1.msra.mxu0 0.0
    %1975 = vmatprep.subr.mxu0 0.0
    %1976 = vmatpush1.msra.mxu0 0.0
    %1977 = vmatprep.subr.mxu0 0.0
    %1978 = vmatpush1.msra.mxu0 0.0
    %1979 = vmatprep.subr.mxu0 0.0
    %1980 = vmatpush1.msra.mxu0 0.0
    %1981 = vmatprep.subr.mxu0 0.0
    %1982 = vmatpush1.msra.mxu0 0.0
    %1983 = vmatprep.subr.mxu0 0.0
    %1984 = vmatpush1.msra.mxu0 0.0
    %1985 = vmatprep.subr.mxu0 0.0
    %1986 = vmatpush1.msra.mxu0 0.0
    %1987 = vmatprep.subr.mxu0 0.0
    %1988 = vmatpush1.msra.mxu0 0.0
    %1989 = vmatprep.subr.mxu0 0.0
    %1990 = vmatpush1.msra.mxu0 0.0
    %1991 = vmatprep.subr.mxu0 0.0
    %1992 = vmatpush1.msra.mxu0 0.0
    %1993 = vmatprep.subr.mxu0 0.0
    %1994 = vmatpush1.msra.mxu0 0.0
    %1995 = vmatprep.subr.mxu0 0.0
    %1996 = vmatpush1.msra.mxu0 0.0
    %1997 = vmatprep.subr.mxu0 0.0
    %1998 = vmatpush1.msra.mxu0 0.0
    %1999 = vmatprep.subr.mxu0 0.0
    %2000 = vmatpush1.msra.mxu0 0.0
    %2001 = vmatprep.subr.mxu0 0.0
    %2002 = vmatpush1.msra.mxu0 0.0
    %2003 = vmatprep.mubr.f32.mxu0 0.0
    %2004 = vmatmul.mubr.f32.gmra.mrb[0].mxu0 %v1934
    %v2005 = vpop.f32.mrb[0].mxu0
    %v2006 = vadd.f32 %v1932, %v2005
    %v2007 = vpop.f32.mrb[0].mxu0
    %2008 = vmatprep.mubr.f32.mxu0 0.0
    %2009 = vmatmul.mubr.f32.gmra.mrb[0].mxu0 %v1937
    %v2010 = vpop.f32.mrb[0].mxu0
    %v2011 = vadd.f32 %v1932, %v2010
    %v2012 = vpop.f32.mrb[0].mxu0
    %2013 = vdwg.mxu0
    %v2014 = vmul.f32 %v2006, 0.5
    %v2015 = vmul.f32 %v2011, 0.5
    %v2016 = vmul.f32 %v2006, 0.70710677
    %v2017 = vmul.f32 %v2011, 0.70710677
    %vm2018 = vcmp.ge.f32.partialorder %v2016, 0.0
    %vm2019 = vcmp.ge.f32.partialorder %v2017, 0.0
    %v2020 = vsel %vm2018, 1.0, -1.0
    %v2021 = vsel %vm2019, 1.0, -1.0
    %v2022 = vand.u32 2147483647, %v2016
    %v2023 = vand.u32 2147483647, %v2017
    %v2024 = vmul.f32 %v2022, 0.3275911
    %v2025 = vmul.f32 %v2023, 0.3275911
    %v2026 = vadd.f32 %v2024, 1.0
    %v2027 = vadd.f32 %v2025, 1.0
    %v2028 = vrcp.pop %v2026
    %v2029 = vmul.f32 1.0, %v2028
    %v2030 = vrcp.pop %v2027
    %v2031 = vmul.f32 1.0, %v2030
    %v2032 = vmul.f32 %v2029, 1.0614054
    %v2033 = vmul.f32 %v2031, 1.0614054
    %v2034 = vadd.f32 %v2032, -1.4531521
    %v2035 = vadd.f32 %v2033, -1.4531521
    %v2036 = vmul.f32 %v2034, %v2029
    %v2037 = vmul.f32 %v2035, %v2031
    %v2038 = vadd.f32 %v2036, 1.4214138
    %v2039 = vadd.f32 %v2037, 1.4214138
    %v2040 = vmul.f32 %v2038, %v2029
    %v2041 = vmul.f32 %v2039, %v2031
    %v2042 = vadd.f32 %v2040, -0.28449672
    %v2043 = vadd.f32 %v2041, -0.28449672
    %v2044 = vmul.f32 %v2042, %v2029
    %v2045 = vmul.f32 %v2043, %v2031
    %v2046 = vadd.f32 %v2044, 0.2548296
    %v2047 = vadd.f32 %v2045, 0.2548296
    %v2048 = vmul.f32 %v2046, %v2029
    %v2049 = vmul.f32 %v2047, %v2031
    %v2050 = vsub.f32 0.0, %v2022
    %v2051 = vsub.f32 0.0, %v2023
    %v2052 = vmul.f32 %v2050, %v2022
    %v2053 = vmul.f32 %v2051, %v2023
    %v2054 = vmul.f32 %v2052, 1.442695
    %v2055 = vpow.pop %v2054
    %v2056 = vmul.f32 %v2053, 1.442695
    %v2057 = vpow.pop %v2056
    %v2058 = vmul.f32 %v2048, %v2055
    %v2059 = vmul.f32 %v2049, %v2057
    %v2060 = vsub.f32 1.0, %v2058
    %v2061 = vsub.f32 1.0, %v2059
    %v2062 = vmul.f32 %v2020, %v2060
    %v2063 = vmul.f32 %v2021, %v2061
    %v2064 = vadd.f32 %v2062, 1.0
    %v2065 = vadd.f32 %v2063, 1.0
    %v2066 = vmul.f32 %v2014, %v2064
    %v2067 = vmul.f32 %v2015, %v2065
    %v2068 = vlaneseq
    %v2069 = vshrl.u32 %v2068, 7
    %v2070 = vsub.s32 0, %v2069
    %v2071 = vrot.slane %v52, %v2070
    %2072 = vmatprep.subr.mxu0 0.0
    %2073 = vmatpush1.msra.mxu0 %v61
    %2074 = vmatprep.subr.mxu0 0.0
    %2075 = vmatpush1.msra.mxu0 %v62
    %2076 = vmatprep.subr.mxu0 0.0
    %2077 = vmatpush1.msra.mxu0 %v63
    %2078 = vmatprep.subr.mxu0 0.0
    %2079 = vmatpush1.msra.mxu0 %v64
    %2080 = vmatprep.subr.mxu0 0.0
    %2081 = vmatpush1.msra.mxu0 %v65
    %2082 = vmatprep.subr.mxu0 0.0
    %2083 = vmatpush1.msra.mxu0 %v66
    %2084 = vmatprep.subr.mxu0 0.0
    %2085 = vmatpush1.msra.mxu0 %v67
    %2086 = vmatprep.subr.mxu0 0.0
    %2087 = vmatpush1.msra.mxu0 %v68
    %2088 = vmatprep.subr.mxu0 0.0
    %2089 = vmatpush1.msra.mxu0 %v69
    %2090 = vmatprep.subr.mxu0 0.0
    %2091 = vmatpush1.msra.mxu0 %v70
    %2092 = vmatprep.subr.mxu0 0.0
    %2093 = vmatpush1.msra.mxu0 %v71
    %2094 = vmatprep.subr.mxu0 0.0
    %2095 = vmatpush1.msra.mxu0 %v72
    %2096 = vmatprep.subr.mxu0 0.0
    %2097 = vmatpush1.msra.mxu0 %v73
    %2098 = vmatprep.subr.mxu0 0.0
    %2099 = vmatpush1.msra.mxu0 %v74
    %2100 = vmatprep.subr.mxu0 0.0
    %2101 = vmatpush1.msra.mxu0 %v75
    %2102 = vmatprep.subr.mxu0 0.0
    %2103 = vmatpush1.msra.mxu0 %v76
    %2104 = vmatprep.subr.mxu0 0.0
    %2105 = vmatpush1.msra.mxu0 0.0
    %2106 = vmatprep.subr.mxu0 0.0
    %2107 = vmatpush1.msra.mxu0 0.0
    %2108 = vmatprep.subr.mxu0 0.0
    %2109 = vmatpush1.msra.mxu0 0.0
    %2110 = vmatprep.subr.mxu0 0.0
    %2111 = vmatpush1.msra.mxu0 0.0
    %2112 = vmatprep.subr.mxu0 0.0
    %2113 = vmatpush1.msra.mxu0 0.0
    %2114 = vmatprep.subr.mxu0 0.0
    %2115 = vmatpush1.msra.mxu0 0.0
    %2116 = vmatprep.subr.mxu0 0.0
    %2117 = vmatpush1.msra.mxu0 0.0
    %2118 = vmatprep.subr.mxu0 0.0
    %2119 = vmatpush1.msra.mxu0 0.0
    %2120 = vmatprep.subr.mxu0 0.0
    %2121 = vmatpush1.msra.mxu0 0.0
    %2122 = vmatprep.subr.mxu0 0.0
    %2123 = vmatpush1.msra.mxu0 0.0
    %2124 = vmatprep.subr.mxu0 0.0
    %2125 = vmatpush1.msra.mxu0 0.0
    %2126 = vmatprep.subr.mxu0 0.0
    %2127 = vmatpush1.msra.mxu0 0.0
    %2128 = vmatprep.subr.mxu0 0.0
    %2129 = vmatpush1.msra.mxu0 0.0
    %2130 = vmatprep.subr.mxu0 0.0
    %2131 = vmatpush1.msra.mxu0 0.0
    %2132 = vmatprep.subr.mxu0 0.0
    %2133 = vmatpush1.msra.mxu0 0.0
    %2134 = vmatprep.subr.mxu0 0.0
    %2135 = vmatpush1.msra.mxu0 0.0
    %2136 = vmatprep.mubr.f32.mxu0 0.0
    %2137 = vmatmul.mubr.f32.gmra.mrb[0].mxu0 %v2066
    %v2138 = vpop.f32.mrb[0].mxu0
    %v2139 = vadd.f32 %v2071, %v2138
    %v2140 = vpop.f32.mrb[0].mxu0
    %2141 = vmatprep.mubr.f32.mxu0 0.0
    %2142 = vmatmul.mubr.f32.gmra.mrb[0].mxu0 %v2067
    %v2143 = vpop.f32.mrb[0].mxu0
    %v2144 = vadd.f32 %v2071, %v2143
    %v2145 = vpop.f32.mrb[0].mxu0
    %2146 = vdwg.mxu0
    %v2147 = vadd.f32 %v1927, %v2139
    %v2148 = vadd.f32 %v1928, %v2144
    %2149 = vst.msk [vmem:[#allocation7] sm:$0xff] %vm77, %v2147
    %2150 = vst.msk [vmem:[#allocation7 + $0x8] sm:$0xff] %vm77, %v2148
    // Predicated region
    $region22: #{transformer_block.1} parent=1 // pred_check
      _
    $region23: #{transformer_block.1} parent=1 // pred_check_branch
      %2152 = sbr.rel (0) target = $region25
    $region24: #{transformer_block.1} parent=1 // pred_region
      %s2154 = ssub.s32 256, 256
      %2155 = vsyncadd [#allocation4], %s2154
      %s2156 = sshll.u32 [#allocation7], 4
      %s2157 = int_to_ptr.vmem [resolvable:$true] %s2156
      %2162 = dma.vmem_to_hbm [thread:$0]  %s2157, 256, %s3, [#allocation4], 128, 128, 8
    $region25: #{transformer_block.1} parent=1 // pred_fallthru
      _
    // Predicated region
    $region26: #{transformer_block.1} parent=1 // pred_check
      _
    $region27: #{transformer_block.1} parent=1 // pred_check_branch
      %2164 = sbr.rel (0) target = $region29
    $region28: #{transformer_block.1} parent=1 // pred_region
      %2165 = dma.done [#allocation4], 256
    $region29: #{transformer_block.1} parent=1 // pred_fallthru
      _
    %2166 = vsyncpa [#allocation3], 1
    %2167 = vsyncpa [#allocation6], 1
    %2168 = vsyncpa [#allocation4], 1

</llo_original>
